<compile_context>
chip_gen: v5e
topology: v5e:2x2
jax: 0.10.0
libtpu: 0.0.40
codegen_flags: <defaults>
</compile_context>

<pallas_src>
import jax
import jax.numpy as jnp
from jax.experimental import pallas as pl
from jax.experimental.pallas import tpu as pltpu


def _exp_kernel_attention_kernel(mask_ref, q_ref, k_ref, v_ref, o_ref):
    # mask_ref: (Bt, 1, S, 1)   q/k/v/o_ref: (Bt, H, S, D)
    Bt, H, S, D = q_ref.shape
    N = Bt * H

    # Sequence mask, broadcast over heads (major dim) and head_dim (lanes).
    m = mask_ref[...].astype(jnp.float32)                        # (Bt, 1, S, 1)

    # ---------------- K/V branch first (short live ranges) ----------------
    k = (k_ref[...].astype(jnp.float32) * m).reshape(N, S, D)
    v = (v_ref[...].astype(jnp.float32) * m).reshape(N, S, D)

    # softmax over the sequence axis (sublanes), per (batch, head, d) column.
    k_max = jnp.max(k, axis=1, keepdims=True)                    # (N, 1, D)
    k_exp = jnp.exp(k - k_max)
    k_den = jnp.sum(k_exp, axis=1, keepdims=True)                # (N, 1, D)
    k_sm = k_exp * pl.reciprocal(k_den, approx=True)             # EUP divide

    # dot[n, d, e] = sum_s K_sm[n, s, d] * V[n, s, e]   (per-head K^T @ V)
    dot = jnp.einsum(
        "nsd,nse->nde",
        k_sm.astype(jnp.bfloat16), v.astype(jnp.bfloat16),
        preferred_element_type=jnp.float32).astype(jnp.bfloat16)  # (N, D, D)

    # ------------- Q branch: exact per-head f32 softmax over D -------------
    q = (q_ref[...].astype(jnp.float32) * m).reshape(N, S, D)
    q_max = jnp.max(q, axis=-1, keepdims=True)                   # (N, S, 1) per-head max
    q_exp = jnp.exp(q - q_max)                                   # row max is 1 -> den >= 1
    q_den = jnp.sum(q_exp, axis=-1, keepdims=True)               # (N, S, 1)
    q_sm = q_exp * pl.reciprocal(q_den, approx=True)

    # attn[n, s, e] = sum_d Q_sm[n, s, d] * dot[n, d, e]
    attn = jnp.einsum(
        "nsd,nde->nse",
        q_sm.astype(jnp.bfloat16), dot,
        preferred_element_type=jnp.float32)                      # (N, S, D)

    o_ref[...] = attn.reshape(Bt, H, S, D).astype(o_ref.dtype)


def _pick_batch_block(B, max_block=8):
    """Largest divisor of B that is <= max_block while keeping >= 2 grid steps
    (so v7x's two TensorCores both get work); falls back to B if impossible."""
    divisors = [c for c in range(1, min(B, max_block) + 1) if B % c == 0]
    multi_step = [c for c in divisors if B // c >= 2]
    return max(multi_step) if multi_step else max(divisors)


def _vmem_limit_bytes():
    """Generation-aware scoped-VMEM budget with headroom under physical VMEM."""
    try:
        cap = pltpu.get_tpu_info().vmem_capacity_bytes
    except Exception:
        cap = 64 * 1024 * 1024   # conservative: v7x per-TensorCore VMEM
    # ~25% headroom; never below the 32 MiB scoped default, cap at 100 MiB.
    return max(32 * 1024 * 1024, min(int(cap) * 3 // 4, 100 * 1024 * 1024))


def exp_kernel_attention(Q, K, V, mask, *, batch_block=None):
    """Q, K, V: [B, H, S, D]; mask: [B, S] -> [B, H, S, D] (dtype follows Q)."""
    B, H, S, D = Q.shape
    Bt = batch_block if batch_block is not None else _pick_batch_block(B)
    assert B % Bt == 0, "batch_block must divide the batch size"

    # The mask is tiny (B*S elems); reshape to a broadcastable (B, 1, S, 1) so
    # its BlockSpec places no (8, 128) constraint on the batch block size.
    mask_r = mask.reshape(B, 1, S, 1).astype(Q.dtype)

    qkv_spec = pl.BlockSpec((Bt, H, S, D), lambda b: (b, 0, 0, 0))
    mask_spec = pl.BlockSpec((Bt, 1, S, 1), lambda b: (b, 0, 0, 0))

    return pl.pallas_call(
        _exp_kernel_attention_kernel,
        out_shape=jax.ShapeDtypeStruct((B, H, S, D), Q.dtype),
        grid_spec=pltpu.PrefetchScalarGridSpec(
            num_scalar_prefetch=0,
            grid=(B // Bt,),
            in_specs=[mask_spec, qkv_spec, qkv_spec, qkv_spec],
            out_specs=qkv_spec,
        ),
        compiler_params=pltpu.CompilerParams(
            dimension_semantics=("parallel",),
            vmem_limit_bytes=_vmem_limit_bytes(),
        ),
    )(mask_r, Q, K, V)


def _reference(Q, K, V, mask):
    m = mask[:, None, :, None].astype(jnp.float32)
    Qm = Q.astype(jnp.float32) * m
    Km = K.astype(jnp.float32) * m
    Vm = V.astype(jnp.float32) * m
    Qs = jax.nn.softmax(Qm, axis=-1)
    Ks = jax.nn.softmax(Km, axis=-2)
    dot = jnp.einsum("bhsd,bhse->bhde", Ks, Vm)
    return jnp.einsum("bhsd,bhde->bhse", Qs, dot)


if __name__ == "__main__":
    key = jax.random.PRNGKey(0)
    kq, kk, kv, km = jax.random.split(key, 4)

    B, H, S, D = 8, 4, 16, 32       # D == config['head_dim']
    Q = jax.random.normal(kq, (B, H, S, D), dtype=jnp.float32)
    K = jax.random.normal(kk, (B, H, S, D), dtype=jnp.float32)
    V = jax.random.normal(kv, (B, H, S, D), dtype=jnp.float32)
    mask = (jax.random.uniform(km, (B, S)) > 0.3).astype(jnp.float32)

    ref = _reference(Q, K, V, mask)

    # f32 I/O path.
    out = jax.block_until_ready(exp_kernel_attention(Q, K, V, mask))
    assert out.shape == (B, H, S, D)
    # bf16 MXU operands + approx EUP reciprocal => relaxed tolerance vs f32 ref.
    assert jnp.allclose(out, ref, atol=2e-2, rtol=2e-2), "f32 mismatch vs reference"

    # bf16 I/O path (halves HBM traffic on this memory-bound kernel).
    out_bf16 = jax.block_until_ready(
        exp_kernel_attention(Q.astype(jnp.bfloat16), K.astype(jnp.bfloat16),
                             V.astype(jnp.bfloat16), mask))
    assert out_bf16.shape == (B, H, S, D) and out_bf16.dtype == jnp.bfloat16
    out_bf16_f32 = out_bf16.astype(jnp.float32)
    assert bool(jnp.all(jnp.isfinite(out_bf16_f32)))
    assert jnp.allclose(out_bf16_f32, ref, atol=1.25e-1, rtol=1.25e-1), \
        "bf16 mismatch vs reference"

    print("KERNEL_OK")
</pallas_src>

<mosaic_0001>
module attributes {stable_mosaic.version = 11 : i64} {
  func.func @_exp_kernel_attention_kernel(%arg0: i32, %arg1: memref<4x1x16x1xf32, #tpu.memory_space<vmem>>, %arg2: memref<4x4x16x32xf32, #tpu.memory_space<vmem>>, %arg3: memref<4x4x16x32xf32, #tpu.memory_space<vmem>>, %arg4: memref<4x4x16x32xf32, #tpu.memory_space<vmem>>, %arg5: memref<4x4x16x32xf32, #tpu.memory_space<vmem>>) attributes {dimension_semantics = [#tpu.dimension_semantics<parallel>], iteration_bounds = array<i64: 2>, scalar_prefetch = 0 : i64, scratch_operands = 0 : i64, tpu.core_type = #tpu.core_type<tc>, window_params = [{transform_indices = @transform_0, window_bounds = array<i64: 4, 1, 16, 1>}, {transform_indices = @transform_1, window_bounds = array<i64: 4, 4, 16, 32>}, {transform_indices = @transform_2, window_bounds = array<i64: 4, 4, 16, 32>}, {transform_indices = @transform_3, window_bounds = array<i64: 4, 4, 16, 32>}, {transform_indices = @transform_4, window_bounds = array<i64: 4, 4, 16, 32>}]} {
    %c0 = arith.constant 0 : index
    %c0_0 = arith.constant 0 : index
    %c0_1 = arith.constant 0 : index
    %c0_2 = arith.constant 0 : index
    %0 = vector.load %arg1[%c0, %c0_0, %c0_1, %c0_2] : memref<4x1x16x1xf32, #tpu.memory_space<vmem>>, vector<4x1x16x1xf32>
    %c0_3 = arith.constant 0 : index
    %c0_4 = arith.constant 0 : index
    %c0_5 = arith.constant 0 : index
    %c0_6 = arith.constant 0 : index
    %1 = vector.load %arg3[%c0_3, %c0_4, %c0_5, %c0_6] : memref<4x4x16x32xf32, #tpu.memory_space<vmem>>, vector<4x4x16x32xf32>
    %2 = vector.broadcast %0 : vector<4x1x16x1xf32> to vector<4x4x16x32xf32>
    %3 = arith.mulf %1, %2 : vector<4x4x16x32xf32>
    %4 = vector.shape_cast %3 : vector<4x4x16x32xf32> to vector<16x16x32xf32>
    %c0_7 = arith.constant 0 : index
    %c0_8 = arith.constant 0 : index
    %c0_9 = arith.constant 0 : index
    %c0_10 = arith.constant 0 : index
    %5 = vector.load %arg4[%c0_7, %c0_8, %c0_9, %c0_10] : memref<4x4x16x32xf32, #tpu.memory_space<vmem>>, vector<4x4x16x32xf32>
    %6 = vector.broadcast %0 : vector<4x1x16x1xf32> to vector<4x4x16x32xf32>
    %7 = arith.mulf %5, %6 : vector<4x4x16x32xf32>
    %8 = vector.shape_cast %7 : vector<4x4x16x32xf32> to vector<16x16x32xf32>
    %cst = arith.constant dense<0xFF800000> : vector<16x32xf32>
    %9 = vector.multi_reduction <maximumf>, %4, %cst [1] : vector<16x16x32xf32> to vector<16x32xf32>
    %10 = vector.shape_cast %9 : vector<16x32xf32> to vector<16x1x32xf32>
    %11 = vector.broadcast %10 : vector<16x1x32xf32> to vector<16x16x32xf32>
    %12 = arith.subf %4, %11 : vector<16x16x32xf32>
    %13 = math.exp %12 : vector<16x16x32xf32>
    %cst_11 = arith.constant dense<0.000000e+00> : vector<16x32xf32>
    %14 = vector.multi_reduction <add>, %13, %cst_11 [1] : vector<16x16x32xf32> to vector<16x32xf32>
    %15 = vector.shape_cast %14 : vector<16x32xf32> to vector<16x1x32xf32>
    %16 = tpu.reciprocal %15 {approx = true} : vector<16x1x32xf32> -> vector<16x1x32xf32>
    %17 = vector.broadcast %16 : vector<16x1x32xf32> to vector<16x16x32xf32>
    %18 = arith.mulf %13, %17 : vector<16x16x32xf32>
    %19 = arith.truncf %18 : vector<16x16x32xf32> to vector<16x16x32xbf16>
    %20 = arith.truncf %8 : vector<16x16x32xf32> to vector<16x16x32xbf16>
    "tpu.trace_start"() <{level = 10 : i32, message = "nsd,nse->nde"}> : () -> ()
    %cst_12 = arith.constant dense<0.000000e+00> : vector<16x32x32xf32>
    %21 = tpu.matmul %19, %20, %cst_12 {dimension_numbers = #tpu.dot_dimension_numbers<[1], [1], [2], [2], [0, 0, 0, 2, 1, 2], [0], [0]>} : vector<16x16x32xbf16>, vector<16x16x32xbf16>, vector<16x32x32xf32> -> vector<16x32x32xf32>
    "tpu.trace_stop"() : () -> ()
    %22 = arith.truncf %21 : vector<16x32x32xf32> to vector<16x32x32xbf16>
    %c0_13 = arith.constant 0 : index
    %c0_14 = arith.constant 0 : index
    %c0_15 = arith.constant 0 : index
    %c0_16 = arith.constant 0 : index
    %23 = vector.load %arg2[%c0_13, %c0_14, %c0_15, %c0_16] : memref<4x4x16x32xf32, #tpu.memory_space<vmem>>, vector<4x4x16x32xf32>
    %24 = vector.broadcast %0 : vector<4x1x16x1xf32> to vector<4x4x16x32xf32>
    %25 = arith.mulf %23, %24 : vector<4x4x16x32xf32>
    %26 = vector.shape_cast %25 : vector<4x4x16x32xf32> to vector<16x16x32xf32>
    %cst_17 = arith.constant dense<0xFF800000> : vector<16x16xf32>
    %27 = vector.multi_reduction <maximumf>, %26, %cst_17 [2] : vector<16x16x32xf32> to vector<16x16xf32>
    %28 = vector.shape_cast %27 : vector<16x16xf32> to vector<16x16x1xf32>
    %29 = vector.broadcast %28 : vector<16x16x1xf32> to vector<16x16x32xf32>
    %30 = arith.subf %26, %29 : vector<16x16x32xf32>
    %31 = math.exp %30 : vector<16x16x32xf32>
    %cst_18 = arith.constant dense<0.000000e+00> : vector<16x16xf32>
    %32 = vector.multi_reduction <add>, %31, %cst_18 [2] : vector<16x16x32xf32> to vector<16x16xf32>
    %33 = vector.shape_cast %32 : vector<16x16xf32> to vector<16x16x1xf32>
    %34 = tpu.reciprocal %33 {approx = true} : vector<16x16x1xf32> -> vector<16x16x1xf32>
    %35 = vector.broadcast %34 : vector<16x16x1xf32> to vector<16x16x32xf32>
    %36 = arith.mulf %31, %35 : vector<16x16x32xf32>
    %37 = arith.truncf %36 : vector<16x16x32xf32> to vector<16x16x32xbf16>
    "tpu.trace_start"() <{level = 10 : i32, message = "nsd,nde->nse"}> : () -> ()
    %cst_19 = arith.constant dense<0.000000e+00> : vector<16x16x32xf32>
    %38 = tpu.matmul %37, %22, %cst_19 {dimension_numbers = #tpu.dot_dimension_numbers<[2], [1], [1], [2], [0, 0, 0, 1, 1, 2], [0], [0]>} : vector<16x16x32xbf16>, vector<16x32x32xbf16>, vector<16x16x32xf32> -> vector<16x16x32xf32>
    "tpu.trace_stop"() : () -> ()
    %39 = vector.shape_cast %38 : vector<16x16x32xf32> to vector<4x4x16x32xf32>
    %c0_20 = arith.constant 0 : index
    %c0_21 = arith.constant 0 : index
    %c0_22 = arith.constant 0 : index
    %c0_23 = arith.constant 0 : index
    %40 = vector.load %arg5[%c0_20, %c0_21, %c0_22, %c0_23] : memref<4x4x16x32xf32, #tpu.memory_space<vmem>>, vector<4x4x16x32xf32>
    tpu.vector_store %arg5[%c0_20, %c0_21, %c0_22, %c0_23], %39 {strides = array<i32>} : memref<4x4x16x32xf32, #tpu.memory_space<vmem>>, vector<4x4x16x32xf32>,
    return
  }
  func.func @transform_0(%arg0: i32) -> (i32, i32, i32, i32) {
    %c0_i32 = arith.constant 0 : i32
    %c0_i32_0 = arith.constant 0 : i32
    %c0_i32_1 = arith.constant 0 : i32
    %c0_i32_2 = arith.constant 0 : i32
    return %arg0, %c0_i32, %c0_i32_0, %c0_i32_1 : i32, i32, i32, i32
  }
  func.func @transform_1(%arg0: i32) -> (i32, i32, i32, i32) {
    %c0_i32 = arith.constant 0 : i32
    %c0_i32_0 = arith.constant 0 : i32
    %c0_i32_1 = arith.constant 0 : i32
    %c0_i32_2 = arith.constant 0 : i32
    return %arg0, %c0_i32, %c0_i32_0, %c0_i32_1 : i32, i32, i32, i32
  }
  func.func @transform_2(%arg0: i32) -> (i32, i32, i32, i32) {
    %c0_i32 = arith.constant 0 : i32
    %c0_i32_0 = arith.constant 0 : i32
    %c0_i32_1 = arith.constant 0 : i32
    %c0_i32_2 = arith.constant 0 : i32
    return %arg0, %c0_i32, %c0_i32_0, %c0_i32_1 : i32, i32, i32, i32
  }
  func.func @transform_3(%arg0: i32) -> (i32, i32, i32, i32) {
    %c0_i32 = arith.constant 0 : i32
    %c0_i32_0 = arith.constant 0 : i32
    %c0_i32_1 = arith.constant 0 : i32
    %c0_i32_2 = arith.constant 0 : i32
    return %arg0, %c0_i32, %c0_i32_0, %c0_i32_1 : i32, i32, i32, i32
  }
  func.func @transform_4(%arg0: i32) -> (i32, i32, i32, i32) {
    %c0_i32 = arith.constant 0 : i32
    %c0_i32_0 = arith.constant 0 : i32
    %c0_i32_1 = arith.constant 0 : i32
    %c0_i32_2 = arith.constant 0 : i32
    return %arg0, %c0_i32, %c0_i32_0, %c0_i32_1 : i32, i32, i32, i32
  }
}

</mosaic_0001>

<llo_original>
// kernel: tpu_custom_call.1
$region0: #{tpu_custom_call.1}
  #allocation0 [shape = 'u32[]', space=smem, size = 0x4, offset = 0x4, fixed_abs, tag = 'smem constant byte address 0x4 - core index']
  #allocation1 [shape = 'u32[72,128]{1,0:T(1,128)}', space=vmem, size = 0x9000, scoped, tag = 'internal scratch']
  %s0 = inlined_call_operand.vmem [shape: f32[8,1,16,1], index: 0, kind: input, shape index: {}]
  %s1 = inlined_call_operand.hbm [shape: f32[8,4,16,32], index: 1, kind: input, shape index: {}]
  %s2 = inlined_call_operand.hbm [shape: f32[8,4,16,32], index: 2, kind: input, shape index: {}]
  %s3 = inlined_call_operand.hbm [shape: f32[8,4,16,32], index: 3, kind: input, shape index: {}]
  %s4 = inlined_call_operand.hbm [shape: f32[8,4,16,32], index: 4, kind: output, shape index: {}]
  %s5 = sld [smem:[#allocation0]]
  $region61: #{tpu_custom_call.1} parent=0
    _
  %s7 = ssub.s32 1, %s5
  %s8 = scalar_select 0, %s7, %s5
  $region1: #{tpu_custom_call.1} parent=0
    #allocation2 [shape = 'u8[262144]{0}', space=vmem, size = 0x40000, scoped, tag = 'input window, operand 1']
    #allocation3 [shape = 's32[2]{0}', space=sflag, size = 0x8, scoped, tag = 'scoped memory for tpu_custom_call.1']
    #allocation4 [shape = 's32[2]{0}', space=sflag, size = 0x8, scoped, tag = 'scoped memory for tpu_custom_call.1']
    #allocation5 [shape = 'u8[262144]{0}', space=vmem, size = 0x40000, scoped, tag = 'input window, operand 2']
    #allocation6 [shape = 's32[2]{0}', space=sflag, size = 0x8, scoped, tag = 'scoped memory for tpu_custom_call.1']
    #allocation7 [shape = 'u8[262144]{0}', space=vmem, size = 0x40000, scoped, tag = 'input window, operand 3']
    #allocation8 [shape = 'u8[262144]{0}', space=vmem, size = 0x40000, scoped, tag = 'output window, operand 0']
    %9 = vsyncpa [#allocation3], 0
    %s10 = scalar_lea.sflag [#allocation3], 1
    %11 = vsyncpa %s10, 0
    %12 = vsyncpa [#allocation6], 0
    %s13 = scalar_lea.sflag [#allocation6], 1
    %14 = vsyncpa %s13, 0
    %15 = vsyncpa [#allocation4], 0
    %s16 = scalar_lea.sflag [#allocation4], 1
    %17 = vsyncpa %s16, 0
    loop: start=0, step=1, limit=4
    $region2: #{tpu_custom_call.1} parent=1 // loop_pre_header
      _
    $region3: #{tpu_custom_call.1} parent=1 // loop_header
      %s19 = sphi 0, %s23
      %p20 = scmp.ge.s32.totalorder %s19, 4
      %s29 = sphi 0, %s31
      %s32 = sphi 0, %s29
      %s33 = sphi 0, %s32
      %s49 = sphi 0, %s33
      %s55 = sphi 0, %s57
      %s58 = sphi 0, %s55
      %s59 = sphi 0, %s58
      %s75 = sphi 0, %s59
      %s81 = sphi 0, %s83
      %s84 = sphi 0, %s81
      %s85 = sphi 0, %s84
      %s101 = sphi 0, %s85
      %s107 = sphi 0, %s109
      %s110 = sphi 0, %s107
      %s111 = sphi 0, %s110
      %s127 = sphi 0, %s111
      %s133 = sphi 0, %s135
      %s136 = sphi 0, %s133
      %s137 = sphi 0, %s136
      %s153 = sphi 0, %s137
    $region4: #{tpu_custom_call.1} parent=1 // loop_header_branch
      %22 = sbr.rel (%p20) target = $region8
    $region5: #{tpu_custom_call.1} parent=1 // loop_body
      %s24 = ssub.s32 %s19, 1
      %s25 = ssub.s32 %s19, 2
      %s26 = sadd.s32 %s19, 1
      %s27 = ssub.s32 %s19, %s26
      %p28 = scmp.eq.s32.totalorder %s27, 0
      %s30 = sadd.s32 %s29, 1
      %s31 = scalar_select %p28, %s29, %s30
      %p34 = pneg %p28
      %p35 = scmp.eq.s32.totalorder %s19, 1
      %p36 = por %p34, %p35
      %p37 = scmp.ne.s32.totalorder %s29, %s32
      %p38 = scmp.eq.s32.totalorder %s19, 0
      %p39 = por %p37, %p38
      %p40 = scmp.ne.s32.totalorder %s29, %s32
      %p41 = scmp.eq.s32.totalorder %s24, 1
      %p42 = por %p40, %p41
      %p43 = scmp.ne.s32.totalorder %s32, %s33
      %p44 = scmp.eq.s32.totalorder %s24, 0
      %p45 = por %p43, %p44
      %p46 = scmp.ne.s32.totalorder %s32, %s33
      %p47 = scmp.eq.s32.totalorder %s25, 1
      %p48 = por %p46, %p47
      %p50 = scmp.ne.s32.totalorder %s33, %s49
      %p51 = scmp.eq.s32.totalorder %s25, 0
      %p52 = por %p50, %p51
      %s53 = ssub.s32 %s19, %s26
      %p54 = scmp.eq.s32.totalorder %s53, 0
      %s56 = sadd.s32 %s55, 1
      %s57 = scalar_select %p54, %s55, %s56
      %p60 = pneg %p54
      %p61 = scmp.eq.s32.totalorder %s19, 1
      %p62 = por %p60, %p61
      %p63 = scmp.ne.s32.totalorder %s55, %s58
      %p64 = scmp.eq.s32.totalorder %s19, 0
      %p65 = por %p63, %p64
      %p66 = scmp.ne.s32.totalorder %s55, %s58
      %p67 = scmp.eq.s32.totalorder %s24, 1
      %p68 = por %p66, %p67
      %p69 = scmp.ne.s32.totalorder %s58, %s59
      %p70 = scmp.eq.s32.totalorder %s24, 0
      %p71 = por %p69, %p70
      %p72 = scmp.ne.s32.totalorder %s58, %s59
      %p73 = scmp.eq.s32.totalorder %s25, 1
      %p74 = por %p72, %p73
      %p76 = scmp.ne.s32.totalorder %s59, %s75
      %p77 = scmp.eq.s32.totalorder %s25, 0
      %p78 = por %p76, %p77
      %s79 = ssub.s32 %s19, %s26
      %p80 = scmp.eq.s32.totalorder %s79, 0
      %s82 = sadd.s32 %s81, 1
      %s83 = scalar_select %p80, %s81, %s82
      %p86 = pneg %p80
      %p87 = scmp.eq.s32.totalorder %s19, 1
      %p88 = por %p86, %p87
      %p89 = scmp.ne.s32.totalorder %s81, %s84
      %p90 = scmp.eq.s32.totalorder %s19, 0
      %p91 = por %p89, %p90
      %p92 = scmp.ne.s32.totalorder %s81, %s84
      %p93 = scmp.eq.s32.totalorder %s24, 1
      %p94 = por %p92, %p93
      %p95 = scmp.ne.s32.totalorder %s84, %s85
      %p96 = scmp.eq.s32.totalorder %s24, 0
      %p97 = por %p95, %p96
      %p98 = scmp.ne.s32.totalorder %s84, %s85
      %p99 = scmp.eq.s32.totalorder %s25, 1
      %p100 = por %p98, %p99
      %p102 = scmp.ne.s32.totalorder %s85, %s101
      %p103 = scmp.eq.s32.totalorder %s25, 0
      %p104 = por %p102, %p103
      %s105 = ssub.s32 %s19, %s26
      %p106 = scmp.eq.s32.totalorder %s105, 0
      %s108 = sadd.s32 %s107, 1
      %s109 = scalar_select %p106, %s107, %s108
      %p112 = pneg %p106
      %p113 = scmp.eq.s32.totalorder %s19, 1
      %p114 = por %p112, %p113
      %p115 = scmp.ne.s32.totalorder %s107, %s110
      %p116 = scmp.eq.s32.totalorder %s19, 0
      %p117 = por %p115, %p116
      %p118 = scmp.ne.s32.totalorder %s107, %s110
      %p119 = scmp.eq.s32.totalorder %s24, 1
      %p120 = por %p118, %p119
      %p121 = scmp.ne.s32.totalorder %s110, %s111
      %p122 = scmp.eq.s32.totalorder %s24, 0
      %p123 = por %p121, %p122
      %p124 = scmp.ne.s32.totalorder %s110, %s111
      %p125 = scmp.eq.s32.totalorder %s25, 1
      %p126 = por %p124, %p125
      %p128 = scmp.ne.s32.totalorder %s111, %s127
      %p129 = scmp.eq.s32.totalorder %s25, 0
      %p130 = por %p128, %p129
      %s131 = ssub.s32 %s19, %s26
      %p132 = scmp.eq.s32.totalorder %s131, 0
      %s134 = sadd.s32 %s133, 1
      %s135 = scalar_select %p132, %s133, %s134
      %p138 = pneg %p132
      %p139 = scmp.eq.s32.totalorder %s19, 1
      %p140 = por %p138, %p139
      %p141 = scmp.ne.s32.totalorder %s133, %s136
      %p142 = scmp.eq.s32.totalorder %s19, 0
      %p143 = por %p141, %p142
      %p144 = scmp.ne.s32.totalorder %s133, %s136
      %p145 = scmp.eq.s32.totalorder %s24, 1
      %p146 = por %p144, %p145
      %p147 = scmp.ne.s32.totalorder %s136, %s137
      %p148 = scmp.eq.s32.totalorder %s24, 0
      %p149 = por %p147, %p148
      %p150 = scmp.ne.s32.totalorder %s136, %s137
      %p151 = scmp.eq.s32.totalorder %s25, 1
      %p152 = por %p150, %p151
      %p154 = scmp.ne.s32.totalorder %s137, %s153
      %p155 = scmp.eq.s32.totalorder %s25, 0
      %p156 = por %p154, %p155
      %p157 = scmp.le.s32.totalorder 1, %s19
      %p158 = scmp.lt.s32.totalorder %s19, 3
      %p159 = pnand %p157, %p158
      %p160 = pneg %p159
      // Predicated region
      $region9: #{tpu_custom_call.1} parent=5 // pred_check
        _
      $region10: #{tpu_custom_call.1} parent=5 // pred_check_branch
        %162 = sbr.rel (%p159) target = $region12
      $region11: #{tpu_custom_call.1} parent=5 // pred_region
        %s163 = ssub.s32 %s19, 1
      $region12: #{tpu_custom_call.1} parent=5 // pred_fallthru
        _
      %p164 = scmp.lt.s32.totalorder %s19, 2
      // Predicated region
      $region13: #{tpu_custom_call.1} parent=5 // pred_check
        %p165 = pneg %p164
      $region14: #{tpu_custom_call.1} parent=5 // pred_check_branch
        %167 = sbr.rel (%p165) target = $region16
      $region15: #{tpu_custom_call.1} parent=5 // pred_region
        // Predicated region
        $region17: #{tpu_custom_call.1} parent=15 // pred_check
          %p168 = pneg %p39
        $region18: #{tpu_custom_call.1} parent=15 // pred_check_branch
          %170 = sbr.rel (%p168) target = $region20
        $region19: #{tpu_custom_call.1} parent=15 // pred_region
          %s171 = smul.u32 4, %s19
          %p172 = scmp.lt.s32.totalorder %s171, 7
          %s173 = scalar_select %p172, %s171, 7
          %s174 = smul.addr %s173, 2
          %s175 = smul.addr %s174, 8
          %s176 = scalar_lea.vmem %s0, %s175
          %s177 = smul.u32 4, %s19
        $region20: #{tpu_custom_call.1} parent=15 // pred_fallthru
          _
        // Predicated region
        $region21: #{tpu_custom_call.1} parent=15 // pred_check
          %p178 = pneg %p65
        $region22: #{tpu_custom_call.1} parent=15 // pred_check_branch
          %180 = sbr.rel (%p178) target = $region24
        $region23: #{tpu_custom_call.1} parent=15 // pred_region
          %s181 = sand.u32 %s55, 1
          %s182 = scalar_lea.sflag [#allocation3], %s181
          %s183 = sand.u32 %s55, 1
          %s184 = smul.addr %s183, 256
          %s185 = scalar_lea.vmem [#allocation2], %s184
          %s186 = smul.u32 4, %s19
          %188 = vsyncadd %s182, 0
          %s189 = smul.addr %s186, 8
          %s190 = smul.addr %s189, 8
          %s191 = scalar_lea.hbm %s1, %s190
          %s192 = sshll.u32 %s191, 4
          %s193 = int_to_ptr.hbm [resolvable:$true] %s192
          %s194 = sshll.u32 %s185, 4
          %s195 = int_to_ptr.vmem [resolvable:$true] %s194
          %200 = dma.hbm_to_vmem [thread:$0]  %s193, 4096, %s195, %s182, 128, 128, 8
        $region24: #{tpu_custom_call.1} parent=15 // pred_fallthru
          _
        // Predicated region
        $region25: #{tpu_custom_call.1} parent=15 // pred_check
          %p201 = pneg %p91
        $region26: #{tpu_custom_call.1} parent=15 // pred_check_branch
          %203 = sbr.rel (%p201) target = $region28
        $region27: #{tpu_custom_call.1} parent=15 // pred_region
          %s204 = sand.u32 %s19, 1
          %s205 = scalar_lea.sflag [#allocation6], %s204
          %s206 = sand.u32 %s81, 1
          %s207 = smul.addr %s206, 256
          %s208 = scalar_lea.vmem [#allocation5], %s207
          %s209 = smul.u32 4, %s19
          %211 = vsyncadd %s205, 0
          %s212 = smul.addr %s209, 8
          %s213 = smul.addr %s212, 8
          %s214 = scalar_lea.hbm %s2, %s213
          %s215 = sshll.u32 %s214, 4
          %s216 = int_to_ptr.hbm [resolvable:$true] %s215
          %s217 = sshll.u32 %s208, 4
          %s218 = int_to_ptr.vmem [resolvable:$true] %s217
          %223 = dma.hbm_to_vmem [thread:$0]  %s216, 4096, %s218, %s205, 128, 128, 8
        $region28: #{tpu_custom_call.1} parent=15 // pred_fallthru
          _
        // Predicated region
        $region29: #{tpu_custom_call.1} parent=15 // pred_check
          %p224 = pneg %p117
        $region30: #{tpu_custom_call.1} parent=15 // pred_check_branch
          %226 = sbr.rel (%p224) target = $region32
        $region31: #{tpu_custom_call.1} parent=15 // pred_region
          %s227 = sand.u32 %s19, 1
          %s228 = scalar_lea.sflag [#allocation6], %s227
          %s229 = sand.u32 %s107, 1
          %s230 = smul.addr %s229, 256
          %s231 = scalar_lea.vmem [#allocation7], %s230
          %s232 = smul.u32 4, %s19
          %234 = vsyncadd %s228, 0
          %s235 = smul.addr %s232, 8
          %s236 = smul.addr %s235, 8
          %s237 = scalar_lea.hbm %s3, %s236
          %s238 = sshll.u32 %s237, 4
          %s239 = int_to_ptr.hbm [resolvable:$true] %s238
          %s240 = sshll.u32 %s231, 4
          %s241 = int_to_ptr.vmem [resolvable:$true] %s240
          %246 = dma.hbm_to_vmem [thread:$0]  %s239, 4096, %s241, %s228, 128, 128, 8
        $region32: #{tpu_custom_call.1} parent=15 // pred_fallthru
          _
      $region16: #{tpu_custom_call.1} parent=5 // pred_fallthru
        _
      %p247 = scmp.le.s32.totalorder 1, %s19
      %p248 = scmp.lt.s32.totalorder %s19, 3
      %p249 = pnand %p247, %p248
      %p250 = pneg %p249
      // Predicated region
      $region33: #{tpu_custom_call.1} parent=5 // pred_check
        _
      $region34: #{tpu_custom_call.1} parent=5 // pred_check_branch
        %252 = sbr.rel (%p249) target = $region36
      $region35: #{tpu_custom_call.1} parent=5 // pred_region
        %s253 = ssub.s32 %s19, 1
        %s254 = sand.u32 %s58, 1
        %s255 = scalar_lea.sflag [#allocation3], %s254
        %s256 = sand.u32 %s58, 1
        %s257 = smul.addr %s256, 256
        %s258 = scalar_lea.vmem [#allocation2], %s257
        // Predicated region
        $region37: #{tpu_custom_call.1} parent=35 // pred_check
          %p259 = pneg %p71
        $region38: #{tpu_custom_call.1} parent=35 // pred_check_branch
          %261 = sbr.rel (%p259) target = $region40
        $region39: #{tpu_custom_call.1} parent=35 // pred_region
          %263 = dma.done %s255, 4096
        $region40: #{tpu_custom_call.1} parent=35 // pred_fallthru
          _
        %s264 = sand.u32 %s24, 1
        %s265 = scalar_lea.sflag [#allocation6], %s264
        %s266 = sand.u32 %s84, 1
        %s267 = smul.addr %s266, 256
        %s268 = scalar_lea.vmem [#allocation5], %s267
        // Predicated region
        $region41: #{tpu_custom_call.1} parent=35 // pred_check
          %p269 = pneg %p97
        $region42: #{tpu_custom_call.1} parent=35 // pred_check_branch
          %271 = sbr.rel (%p269) target = $region44
        $region43: #{tpu_custom_call.1} parent=35 // pred_region
          %273 = dma.done %s265, 4096
        $region44: #{tpu_custom_call.1} parent=35 // pred_fallthru
          _
        %s274 = sand.u32 %s24, 1
        %s275 = scalar_lea.sflag [#allocation6], %s274
        %s276 = sand.u32 %s110, 1
        %s277 = smul.addr %s276, 256
        %s278 = scalar_lea.vmem [#allocation7], %s277
        // Predicated region
        $region45: #{tpu_custom_call.1} parent=35 // pred_check
          %p279 = pneg %p123
        $region46: #{tpu_custom_call.1} parent=35 // pred_check_branch
          %281 = sbr.rel (%p279) target = $region48
        $region47: #{tpu_custom_call.1} parent=35 // pred_region
          %283 = dma.done %s275, 4096
        $region48: #{tpu_custom_call.1} parent=35 // pred_fallthru
          _
        %s284 = smul.u32 4, %s24
        %p285 = scmp.lt.s32.totalorder %s284, 7
        %s286 = scalar_select %p285, %s284, 7
        %s287 = smul.addr %s286, 2
        %s288 = smul.addr %s287, 8
        %s289 = scalar_lea.vmem %s0, %s288
        %p290 = pneg %p45
        %p291 = pneg %p42
        %s292 = sand.u32 %s58, 1
        %s293 = scalar_lea.sflag [#allocation3], %s292
        %s294 = sand.u32 %s58, 1
        %s295 = smul.addr %s294, 256
        %s296 = scalar_lea.vmem [#allocation2], %s295
        %p297 = pneg %p71
        %p298 = pneg %p68
        %s299 = sand.u32 %s24, 1
        %s300 = scalar_lea.sflag [#allocation6], %s299
        %s301 = sand.u32 %s84, 1
        %s302 = smul.addr %s301, 256
        %s303 = scalar_lea.vmem [#allocation5], %s302
        %p304 = pneg %p97
        %p305 = pneg %p94
        %s306 = sand.u32 %s24, 1
        %s307 = scalar_lea.sflag [#allocation6], %s306
        %s308 = sand.u32 %s110, 1
        %s309 = smul.addr %s308, 256
        %s310 = scalar_lea.vmem [#allocation7], %s309
        %p311 = pneg %p123
        %p312 = pneg %p120
        %p313 = pneg %p149
        %p314 = pneg %p146
        %s315 = sand.u32 %s136, 1
        %s316 = scalar_lea.sflag [#allocation4], %s315
        %s317 = sand.u32 %s136, 1
        %s318 = smul.addr %s317, 256
        %s319 = scalar_lea.vmem [#allocation8], %s318
        %s320 = smul.u32 4, %s24
        %p321 = scmp.lt.s32.totalorder %s320, 7
        %s322 = scalar_select %p321, %s320, 7
        %s323 = smul.addr %s322, 2
        %s324 = smul.addr %s323, 8
        %s325 = scalar_lea.vmem %s0, %s324
        %s326 = smul.u32 4, %s24
        %s327 = smul.u32 4, %s24
        %s328 = smul.u32 4, %s24
        %s329 = smul.u32 4, %s24
        %s330 = smul.u32 4, %s24
        %v332 = vld [vmem:[%s325] sm:$0xff]
        %v333 = vld [vmem:[%s325 + $0x8] sm:$0xff]
        %v334 = vld [vmem:[%s325 + $0x10] sm:$0xff]
        %v335 = vld [vmem:[%s325 + $0x18] sm:$0xff]
        %v336 = vld [vmem:[%s325 + $0x20] sm:$0xff]
        %v337 = vld [vmem:[%s325 + $0x28] sm:$0xff]
        %v338 = vld [vmem:[%s325 + $0x30] sm:$0xff]
        %v339 = vld [vmem:[%s325 + $0x38] sm:$0xff]
        %v340 = vld [vmem:[%s268] sm:$0xff]
        %v341 = vld [vmem:[%s268 + $0x8] sm:$0xff]
        %v342 = vld [vmem:[%s268 + $0x10] sm:$0xff]
        %v343 = vld [vmem:[%s268 + $0x18] sm:$0xff]
        %v344 = vld [vmem:[%s268 + $0x20] sm:$0xff]
        %v345 = vld [vmem:[%s268 + $0x28] sm:$0xff]
        %v346 = vld [vmem:[%s268 + $0x30] sm:$0xff]
        %v347 = vld [vmem:[%s268 + $0x38] sm:$0xff]
        %v348 = vld [vmem:[%s268 + $0x40] sm:$0xff]
        %v349 = vld [vmem:[%s268 + $0x48] sm:$0xff]
        %v350 = vld [vmem:[%s268 + $0x50] sm:$0xff]
        %v351 = vld [vmem:[%s268 + $0x58] sm:$0xff]
        %v352 = vld [vmem:[%s268 + $0x60] sm:$0xff]
        %v353 = vld [vmem:[%s268 + $0x68] sm:$0xff]
        %v354 = vld [vmem:[%s268 + $0x70] sm:$0xff]
        %v355 = vld [vmem:[%s268 + $0x78] sm:$0xff]
        %v356 = vld [vmem:[%s268 + $0x80] sm:$0xff]
        %v357 = vld [vmem:[%s268 + $0x88] sm:$0xff]
        %v358 = vld [vmem:[%s268 + $0x90] sm:$0xff]
        %v359 = vld [vmem:[%s268 + $0x98] sm:$0xff]
        %v360 = vld [vmem:[%s268 + $0xa0] sm:$0xff]
        %v361 = vld [vmem:[%s268 + $0xa8] sm:$0xff]
        %v362 = vld [vmem:[%s268 + $0xb0] sm:$0xff]
        %v363 = vld [vmem:[%s268 + $0xb8] sm:$0xff]
        %v364 = vld [vmem:[%s268 + $0xc0] sm:$0xff]
        %v365 = vld [vmem:[%s268 + $0xc8] sm:$0xff]
        %v366 = vld [vmem:[%s268 + $0xd0] sm:$0xff]
        %v367 = vld [vmem:[%s268 + $0xd8] sm:$0xff]
        %v368 = vld [vmem:[%s268 + $0xe0] sm:$0xff]
        %v369 = vld [vmem:[%s268 + $0xe8] sm:$0xff]
        %v370 = vld [vmem:[%s268 + $0xf0] sm:$0xff]
        %v371 = vld [vmem:[%s268 + $0xf8] sm:$0xff]
        %373 = vset.pattern.permute.xlu0 0
        %374 = vperm.xlu0 %373, %v332
        %v375 = vpop.permute.xlu0 %374
        %378 = vset.pattern.permute.xlu0 0
        %379 = vperm.xlu0 %378, %v333
        %v380 = vpop.permute.xlu0 %379
        %383 = vset.pattern.permute.xlu0 0
        %384 = vperm.xlu0 %383, %v334
        %v385 = vpop.permute.xlu0 %384
        %388 = vset.pattern.permute.xlu0 0
        %389 = vperm.xlu0 %388, %v335
        %v390 = vpop.permute.xlu0 %389
        %393 = vset.pattern.permute.xlu0 0
        %394 = vperm.xlu0 %393, %v336
        %v395 = vpop.permute.xlu0 %394
        %398 = vset.pattern.permute.xlu0 0
        %399 = vperm.xlu0 %398, %v337
        %v400 = vpop.permute.xlu0 %399
        %403 = vset.pattern.permute.xlu0 0
        %404 = vperm.xlu0 %403, %v338
        %v405 = vpop.permute.xlu0 %404
        %408 = vset.pattern.permute.xlu0 0
        %409 = vperm.xlu0 %408, %v339
        %v410 = vpop.permute.xlu0 %409
        %v412 = vmul.f32 %v340, %v375
        %v413 = vmul.f32 %v341, %v380
        %v414 = vmul.f32 %v342, %v375
        %v415 = vmul.f32 %v343, %v380
        %v416 = vmul.f32 %v344, %v375
        %v417 = vmul.f32 %v345, %v380
        %v418 = vmul.f32 %v346, %v375
        %v419 = vmul.f32 %v347, %v380
        %v420 = vmul.f32 %v348, %v385
        %v421 = vmul.f32 %v349, %v390
        %v422 = vmul.f32 %v350, %v385
        %v423 = vmul.f32 %v351, %v390
        %v424 = vmul.f32 %v352, %v385
        %v425 = vmul.f32 %v353, %v390
        %v426 = vmul.f32 %v354, %v385
        %v427 = vmul.f32 %v355, %v390
        %v428 = vmul.f32 %v356, %v395
        %v429 = vmul.f32 %v357, %v400
        %v430 = vmul.f32 %v358, %v395
        %v431 = vmul.f32 %v359, %v400
        %v432 = vmul.f32 %v360, %v395
        %v433 = vmul.f32 %v361, %v400
        %v434 = vmul.f32 %v362, %v395
        %v435 = vmul.f32 %v363, %v400
        %v436 = vmul.f32 %v364, %v405
        %v437 = vmul.f32 %v365, %v410
        %v438 = vmul.f32 %v366, %v405
        %v439 = vmul.f32 %v367, %v410
        %v440 = vmul.f32 %v368, %v405
        %v441 = vmul.f32 %v369, %v410
        %v442 = vmul.f32 %v370, %v405
        %v443 = vmul.f32 %v371, %v410
        %v444 = vld [vmem:[%s278] sm:$0xff]
        %v445 = vld [vmem:[%s278 + $0x8] sm:$0xff]
        %v446 = vld [vmem:[%s278 + $0x10] sm:$0xff]
        %v447 = vld [vmem:[%s278 + $0x18] sm:$0xff]
        %v448 = vld [vmem:[%s278 + $0x20] sm:$0xff]
        %v449 = vld [vmem:[%s278 + $0x28] sm:$0xff]
        %v450 = vld [vmem:[%s278 + $0x30] sm:$0xff]
        %v451 = vld [vmem:[%s278 + $0x38] sm:$0xff]
        %v452 = vld [vmem:[%s278 + $0x40] sm:$0xff]
        %v453 = vld [vmem:[%s278 + $0x48] sm:$0xff]
        %v454 = vld [vmem:[%s278 + $0x50] sm:$0xff]
        %v455 = vld [vmem:[%s278 + $0x58] sm:$0xff]
        %v456 = vld [vmem:[%s278 + $0x60] sm:$0xff]
        %v457 = vld [vmem:[%s278 + $0x68] sm:$0xff]
        %v458 = vld [vmem:[%s278 + $0x70] sm:$0xff]
        %v459 = vld [vmem:[%s278 + $0x78] sm:$0xff]
        %v460 = vld [vmem:[%s278 + $0x80] sm:$0xff]
        %v461 = vld [vmem:[%s278 + $0x88] sm:$0xff]
        %v462 = vld [vmem:[%s278 + $0x90] sm:$0xff]
        %v463 = vld [vmem:[%s278 + $0x98] sm:$0xff]
        %v464 = vld [vmem:[%s278 + $0xa0] sm:$0xff]
        %v465 = vld [vmem:[%s278 + $0xa8] sm:$0xff]
        %v466 = vld [vmem:[%s278 + $0xb0] sm:$0xff]
        %v467 = vld [vmem:[%s278 + $0xb8] sm:$0xff]
        %v468 = vld [vmem:[%s278 + $0xc0] sm:$0xff]
        %v469 = vld [vmem:[%s278 + $0xc8] sm:$0xff]
        %v470 = vld [vmem:[%s278 + $0xd0] sm:$0xff]
        %v471 = vld [vmem:[%s278 + $0xd8] sm:$0xff]
        %v472 = vld [vmem:[%s278 + $0xe0] sm:$0xff]
        %v473 = vld [vmem:[%s278 + $0xe8] sm:$0xff]
        %v474 = vld [vmem:[%s278 + $0xf0] sm:$0xff]
        %v475 = vld [vmem:[%s278 + $0xf8] sm:$0xff]
        %v476 = vmul.f32 %v444, %v375
        %v477 = vmul.f32 %v445, %v380
        %v478 = vmul.f32 %v446, %v375
        %v479 = vmul.f32 %v447, %v380
        %v480 = vmul.f32 %v448, %v375
        %v481 = vmul.f32 %v449, %v380
        %v482 = vmul.f32 %v450, %v375
        %v483 = vmul.f32 %v451, %v380
        %v484 = vmul.f32 %v452, %v385
        %v485 = vmul.f32 %v453, %v390
        %v486 = vmul.f32 %v454, %v385
        %v487 = vmul.f32 %v455, %v390
        %v488 = vmul.f32 %v456, %v385
        %v489 = vmul.f32 %v457, %v390
        %v490 = vmul.f32 %v458, %v385
        %v491 = vmul.f32 %v459, %v390
        %v492 = vmul.f32 %v460, %v395
        %v493 = vmul.f32 %v461, %v400
        %v494 = vmul.f32 %v462, %v395
        %v495 = vmul.f32 %v463, %v400
        %v496 = vmul.f32 %v464, %v395
        %v497 = vmul.f32 %v465, %v400
        %v498 = vmul.f32 %v466, %v395
        %v499 = vmul.f32 %v467, %v400
        %v500 = vmul.f32 %v468, %v405
        %v501 = vmul.f32 %v469, %v410
        %v502 = vmul.f32 %v470, %v405
        %v503 = vmul.f32 %v471, %v410
        %v504 = vmul.f32 %v472, %v405
        %v505 = vmul.f32 %v473, %v410
        %v506 = vmul.f32 %v474, %v405
        %v507 = vmul.f32 %v475, %v410
        %vm508 = vcmask 261120
        %v509 = vsel %vm508, %v412, -inf
        %v510 = vsel %vm508, %v413, -inf
        %v511 = vmax.f32 %v509, %v510
        %v512 = vrot.slane %v511, 4
        %v513 = vmax.f32 %v511, %v512
        %v514 = vrot.slane %v513, 2
        %v515 = vmax.f32 %v513, %v514
        %v516 = vrot.slane %v515, 1
        %v517 = vmax.f32 %v515, %v516
        %v518 = vsel %vm508, %v414, -inf
        %v519 = vsel %vm508, %v415, -inf
        %v520 = vmax.f32 %v518, %v519
        %v521 = vrot.slane %v520, 4
        %v522 = vmax.f32 %v520, %v521
        %v523 = vrot.slane %v522, 2
        %v524 = vmax.f32 %v522, %v523
        %v525 = vrot.slane %v524, 1
        %v526 = vmax.f32 %v524, %v525
        %v527 = vsel %vm508, %v416, -inf
        %v528 = vsel %vm508, %v417, -inf
        %v529 = vmax.f32 %v527, %v528
        %v530 = vrot.slane %v529, 4
        %v531 = vmax.f32 %v529, %v530
        %v532 = vrot.slane %v531, 2
        %v533 = vmax.f32 %v531, %v532
        %v534 = vrot.slane %v533, 1
        %v535 = vmax.f32 %v533, %v534
        %v536 = vsel %vm508, %v418, -inf
        %v537 = vsel %vm508, %v419, -inf
        %v538 = vmax.f32 %v536, %v537
        %v539 = vrot.slane %v538, 4
        %v540 = vmax.f32 %v538, %v539
        %v541 = vrot.slane %v540, 2
        %v542 = vmax.f32 %v540, %v541
        %v543 = vrot.slane %v542, 1
        %v544 = vmax.f32 %v542, %v543
        %v545 = vsel %vm508, %v420, -inf
        %v546 = vsel %vm508, %v421, -inf
        %v547 = vmax.f32 %v545, %v546
        %v548 = vrot.slane %v547, 4
        %v549 = vmax.f32 %v547, %v548
        %v550 = vrot.slane %v549, 2
        %v551 = vmax.f32 %v549, %v550
        %v552 = vrot.slane %v551, 1
        %v553 = vmax.f32 %v551, %v552
        %v554 = vsel %vm508, %v422, -inf
        %v555 = vsel %vm508, %v423, -inf
        %v556 = vmax.f32 %v554, %v555
        %v557 = vrot.slane %v556, 4
        %v558 = vmax.f32 %v556, %v557
        %v559 = vrot.slane %v558, 2
        %v560 = vmax.f32 %v558, %v559
        %v561 = vrot.slane %v560, 1
        %v562 = vmax.f32 %v560, %v561
        %v563 = vsel %vm508, %v424, -inf
        %v564 = vsel %vm508, %v425, -inf
        %v565 = vmax.f32 %v563, %v564
        %v566 = vrot.slane %v565, 4
        %v567 = vmax.f32 %v565, %v566
        %v568 = vrot.slane %v567, 2
        %v569 = vmax.f32 %v567, %v568
        %v570 = vrot.slane %v569, 1
        %v571 = vmax.f32 %v569, %v570
        %v572 = vsel %vm508, %v426, -inf
        %v573 = vsel %vm508, %v427, -inf
        %v574 = vmax.f32 %v572, %v573
        %v575 = vrot.slane %v574, 4
        %v576 = vmax.f32 %v574, %v575
        %v577 = vrot.slane %v576, 2
        %v578 = vmax.f32 %v576, %v577
        %v579 = vrot.slane %v578, 1
        %v580 = vmax.f32 %v578, %v579
        %v581 = vsel %vm508, %v428, -inf
        %v582 = vsel %vm508, %v429, -inf
        %v583 = vmax.f32 %v581, %v582
        %v584 = vrot.slane %v583, 4
        %v585 = vmax.f32 %v583, %v584
        %v586 = vrot.slane %v585, 2
        %v587 = vmax.f32 %v585, %v586
        %v588 = vrot.slane %v587, 1
        %v589 = vmax.f32 %v587, %v588
        %v590 = vsel %vm508, %v430, -inf
        %v591 = vsel %vm508, %v431, -inf
        %v592 = vmax.f32 %v590, %v591
        %v593 = vrot.slane %v592, 4
        %v594 = vmax.f32 %v592, %v593
        %v595 = vrot.slane %v594, 2
        %v596 = vmax.f32 %v594, %v595
        %v597 = vrot.slane %v596, 1
        %v598 = vmax.f32 %v596, %v597
        %v599 = vsel %vm508, %v432, -inf
        %v600 = vsel %vm508, %v433, -inf
        %v601 = vmax.f32 %v599, %v600
        %v602 = vrot.slane %v601, 4
        %v603 = vmax.f32 %v601, %v602
        %v604 = vrot.slane %v603, 2
        %v605 = vmax.f32 %v603, %v604
        %v606 = vrot.slane %v605, 1
        %v607 = vmax.f32 %v605, %v606
        %v608 = vsel %vm508, %v434, -inf
        %v609 = vsel %vm508, %v435, -inf
        %v610 = vmax.f32 %v608, %v609
        %v611 = vrot.slane %v610, 4
        %v612 = vmax.f32 %v610, %v611
        %v613 = vrot.slane %v612, 2
        %v614 = vmax.f32 %v612, %v613
        %v615 = vrot.slane %v614, 1
        %v616 = vmax.f32 %v614, %v615
        %v617 = vsel %vm508, %v436, -inf
        %v618 = vsel %vm508, %v437, -inf
        %v619 = vmax.f32 %v617, %v618
        %v620 = vrot.slane %v619, 4
        %v621 = vmax.f32 %v619, %v620
        %v622 = vrot.slane %v621, 2
        %v623 = vmax.f32 %v621, %v622
        %v624 = vrot.slane %v623, 1
        %v625 = vmax.f32 %v623, %v624
        %v626 = vsel %vm508, %v438, -inf
        %v627 = vsel %vm508, %v439, -inf
        %v628 = vmax.f32 %v626, %v627
        %v629 = vrot.slane %v628, 4
        %v630 = vmax.f32 %v628, %v629
        %v631 = vrot.slane %v630, 2
        %v632 = vmax.f32 %v630, %v631
        %v633 = vrot.slane %v632, 1
        %v634 = vmax.f32 %v632, %v633
        %v635 = vsel %vm508, %v440, -inf
        %v636 = vsel %vm508, %v441, -inf
        %v637 = vmax.f32 %v635, %v636
        %v638 = vrot.slane %v637, 4
        %v639 = vmax.f32 %v637, %v638
        %v640 = vrot.slane %v639, 2
        %v641 = vmax.f32 %v639, %v640
        %v642 = vrot.slane %v641, 1
        %v643 = vmax.f32 %v641, %v642
        %v644 = vsel %vm508, %v442, -inf
        %v645 = vsel %vm508, %v443, -inf
        %v646 = vmax.f32 %v644, %v645
        %v647 = vrot.slane %v646, 4
        %v648 = vmax.f32 %v646, %v647
        %v649 = vrot.slane %v648, 2
        %v650 = vmax.f32 %v648, %v649
        %v651 = vrot.slane %v650, 1
        %v652 = vmax.f32 %v650, %v651
        %v653 = vsub.f32 %v412, %v517
        %v654 = vsub.f32 %v413, %v517
        %v655 = vsub.f32 %v414, %v526
        %v656 = vsub.f32 %v415, %v526
        %v657 = vsub.f32 %v416, %v535
        %v658 = vsub.f32 %v417, %v535
        %v659 = vsub.f32 %v418, %v544
        %v660 = vsub.f32 %v419, %v544
        %v661 = vsub.f32 %v420, %v553
        %v662 = vsub.f32 %v421, %v553
        %v663 = vsub.f32 %v422, %v562
        %v664 = vsub.f32 %v423, %v562
        %v665 = vsub.f32 %v424, %v571
        %v666 = vsub.f32 %v425, %v571
        %v667 = vsub.f32 %v426, %v580
        %v668 = vsub.f32 %v427, %v580
        %v669 = vsub.f32 %v428, %v589
        %v670 = vsub.f32 %v429, %v589
        %v671 = vsub.f32 %v430, %v598
        %v672 = vsub.f32 %v431, %v598
        %v673 = vsub.f32 %v432, %v607
        %v674 = vsub.f32 %v433, %v607
        %v675 = vsub.f32 %v434, %v616
        %v676 = vsub.f32 %v435, %v616
        %v677 = vsub.f32 %v436, %v625
        %v678 = vsub.f32 %v437, %v625
        %v679 = vsub.f32 %v438, %v634
        %v680 = vsub.f32 %v439, %v634
        %v681 = vsub.f32 %v440, %v643
        %v682 = vsub.f32 %v441, %v643
        %v683 = vsub.f32 %v442, %v652
        %v684 = vsub.f32 %v443, %v652
        %v685 = vmul.f32 %v653, 1.442695
        %v686 = vpow.pop %v685
        %v687 = vmul.f32 %v654, 1.442695
        %v688 = vpow.pop %v687
        %v689 = vmul.f32 %v655, 1.442695
        %v690 = vpow.pop %v689
        %v691 = vmul.f32 %v656, 1.442695
        %v692 = vpow.pop %v691
        %v693 = vmul.f32 %v657, 1.442695
        %v694 = vpow.pop %v693
        %v695 = vmul.f32 %v658, 1.442695
        %v696 = vpow.pop %v695
        %v697 = vmul.f32 %v659, 1.442695
        %v698 = vpow.pop %v697
        %v699 = vmul.f32 %v660, 1.442695
        %v700 = vpow.pop %v699
        %v701 = vmul.f32 %v661, 1.442695
        %v702 = vpow.pop %v701
        %v703 = vmul.f32 %v662, 1.442695
        %v704 = vpow.pop %v703
        %v705 = vmul.f32 %v663, 1.442695
        %v706 = vpow.pop %v705
        %v707 = vmul.f32 %v664, 1.442695
        %v708 = vpow.pop %v707
        %v709 = vmul.f32 %v665, 1.442695
        %v710 = vpow.pop %v709
        %v711 = vmul.f32 %v666, 1.442695
        %v712 = vpow.pop %v711
        %v713 = vmul.f32 %v667, 1.442695
        %v714 = vpow.pop %v713
        %v715 = vmul.f32 %v668, 1.442695
        %v716 = vpow.pop %v715
        %v717 = vmul.f32 %v669, 1.442695
        %v718 = vpow.pop %v717
        %v719 = vmul.f32 %v670, 1.442695
        %v720 = vpow.pop %v719
        %v721 = vmul.f32 %v671, 1.442695
        %v722 = vpow.pop %v721
        %v723 = vmul.f32 %v672, 1.442695
        %v724 = vpow.pop %v723
        %v725 = vmul.f32 %v673, 1.442695
        %v726 = vpow.pop %v725
        %v727 = vmul.f32 %v674, 1.442695
        %v728 = vpow.pop %v727
        %v729 = vmul.f32 %v675, 1.442695
        %v730 = vpow.pop %v729
        %v731 = vmul.f32 %v676, 1.442695
        %v732 = vpow.pop %v731
        %v733 = vmul.f32 %v677, 1.442695
        %v734 = vpow.pop %v733
        %v735 = vmul.f32 %v678, 1.442695
        %v736 = vpow.pop %v735
        %v737 = vmul.f32 %v679, 1.442695
        %v738 = vpow.pop %v737
        %v739 = vmul.f32 %v680, 1.442695
        %v740 = vpow.pop %v739
        %v741 = vmul.f32 %v681, 1.442695
        %v742 = vpow.pop %v741
        %v743 = vmul.f32 %v682, 1.442695
        %v744 = vpow.pop %v743
        %v745 = vmul.f32 %v683, 1.442695
        %v746 = vpow.pop %v745
        %v747 = vmul.f32 %v684, 1.442695
        %v748 = vpow.pop %v747
        %v749 = vsel %vm508, %v686, 0.0
        %v750 = vsel %vm508, %v688, 0.0
        %v751 = vadd.f32 %v749, %v750
        %v752 = vrot.slane %v751, 4
        %v753 = vadd.f32 %v751, %v752
        %v754 = vrot.slane %v753, 2
        %v755 = vadd.f32 %v753, %v754
        %v756 = vrot.slane %v755, 1
        %v757 = vadd.f32 %v755, %v756
        %v758 = vsel %vm508, %v690, 0.0
        %v759 = vsel %vm508, %v692, 0.0
        %v760 = vadd.f32 %v758, %v759
        %v761 = vrot.slane %v760, 4
        %v762 = vadd.f32 %v760, %v761
        %v763 = vrot.slane %v762, 2
        %v764 = vadd.f32 %v762, %v763
        %v765 = vrot.slane %v764, 1
        %v766 = vadd.f32 %v764, %v765
        %v767 = vsel %vm508, %v694, 0.0
        %v768 = vsel %vm508, %v696, 0.0
        %v769 = vadd.f32 %v767, %v768
        %v770 = vrot.slane %v769, 4
        %v771 = vadd.f32 %v769, %v770
        %v772 = vrot.slane %v771, 2
        %v773 = vadd.f32 %v771, %v772
        %v774 = vrot.slane %v773, 1
        %v775 = vadd.f32 %v773, %v774
        %v776 = vsel %vm508, %v698, 0.0
        %v777 = vsel %vm508, %v700, 0.0
        %v778 = vadd.f32 %v776, %v777
        %v779 = vrot.slane %v778, 4
        %v780 = vadd.f32 %v778, %v779
        %v781 = vrot.slane %v780, 2
        %v782 = vadd.f32 %v780, %v781
        %v783 = vrot.slane %v782, 1
        %v784 = vadd.f32 %v782, %v783
        %v785 = vsel %vm508, %v702, 0.0
        %v786 = vsel %vm508, %v704, 0.0
        %v787 = vadd.f32 %v785, %v786
        %v788 = vrot.slane %v787, 4
        %v789 = vadd.f32 %v787, %v788
        %v790 = vrot.slane %v789, 2
        %v791 = vadd.f32 %v789, %v790
        %v792 = vrot.slane %v791, 1
        %v793 = vadd.f32 %v791, %v792
        %v794 = vsel %vm508, %v706, 0.0
        %v795 = vsel %vm508, %v708, 0.0
        %v796 = vadd.f32 %v794, %v795
        %v797 = vrot.slane %v796, 4
        %v798 = vadd.f32 %v796, %v797
        %v799 = vrot.slane %v798, 2
        %v800 = vadd.f32 %v798, %v799
        %v801 = vrot.slane %v800, 1
        %v802 = vadd.f32 %v800, %v801
        %v803 = vsel %vm508, %v710, 0.0
        %v804 = vsel %vm508, %v712, 0.0
        %v805 = vadd.f32 %v803, %v804
        %v806 = vrot.slane %v805, 4
        %v807 = vadd.f32 %v805, %v806
        %v808 = vrot.slane %v807, 2
        %v809 = vadd.f32 %v807, %v808
        %v810 = vrot.slane %v809, 1
        %v811 = vadd.f32 %v809, %v810
        %v812 = vsel %vm508, %v714, 0.0
        %v813 = vsel %vm508, %v716, 0.0
        %v814 = vadd.f32 %v812, %v813
        %v815 = vrot.slane %v814, 4
        %v816 = vadd.f32 %v814, %v815
        %v817 = vrot.slane %v816, 2
        %v818 = vadd.f32 %v816, %v817
        %v819 = vrot.slane %v818, 1
        %v820 = vadd.f32 %v818, %v819
        %v821 = vsel %vm508, %v718, 0.0
        %v822 = vsel %vm508, %v720, 0.0
        %v823 = vadd.f32 %v821, %v822
        %v824 = vrot.slane %v823, 4
        %v825 = vadd.f32 %v823, %v824
        %v826 = vrot.slane %v825, 2
        %v827 = vadd.f32 %v825, %v826
        %v828 = vrot.slane %v827, 1
        %v829 = vadd.f32 %v827, %v828
        %v830 = vsel %vm508, %v722, 0.0
        %v831 = vsel %vm508, %v724, 0.0
        %v832 = vadd.f32 %v830, %v831
        %v833 = vrot.slane %v832, 4
        %v834 = vadd.f32 %v832, %v833
        %v835 = vrot.slane %v834, 2
        %v836 = vadd.f32 %v834, %v835
        %v837 = vrot.slane %v836, 1
        %v838 = vadd.f32 %v836, %v837
        %v839 = vsel %vm508, %v726, 0.0
        %v840 = vsel %vm508, %v728, 0.0
        %v841 = vadd.f32 %v839, %v840
        %v842 = vrot.slane %v841, 4
        %v843 = vadd.f32 %v841, %v842
        %v844 = vrot.slane %v843, 2
        %v845 = vadd.f32 %v843, %v844
        %v846 = vrot.slane %v845, 1
        %v847 = vadd.f32 %v845, %v846
        %v848 = vsel %vm508, %v730, 0.0
        %v849 = vsel %vm508, %v732, 0.0
        %v850 = vadd.f32 %v848, %v849
        %v851 = vrot.slane %v850, 4
        %v852 = vadd.f32 %v850, %v851
        %v853 = vrot.slane %v852, 2
        %v854 = vadd.f32 %v852, %v853
        %v855 = vrot.slane %v854, 1
        %v856 = vadd.f32 %v854, %v855
        %v857 = vsel %vm508, %v734, 0.0
        %v858 = vsel %vm508, %v736, 0.0
        %v859 = vadd.f32 %v857, %v858
        %v860 = vrot.slane %v859, 4
        %v861 = vadd.f32 %v859, %v860
        %v862 = vrot.slane %v861, 2
        %v863 = vadd.f32 %v861, %v862
        %v864 = vrot.slane %v863, 1
        %v865 = vadd.f32 %v863, %v864
        %v866 = vsel %vm508, %v738, 0.0
        %v867 = vsel %vm508, %v740, 0.0
        %v868 = vadd.f32 %v866, %v867
        %v869 = vrot.slane %v868, 4
        %v870 = vadd.f32 %v868, %v869
        %v871 = vrot.slane %v870, 2
        %v872 = vadd.f32 %v870, %v871
        %v873 = vrot.slane %v872, 1
        %v874 = vadd.f32 %v872, %v873
        %v875 = vsel %vm508, %v742, 0.0
        %v876 = vsel %vm508, %v744, 0.0
        %v877 = vadd.f32 %v875, %v876
        %v878 = vrot.slane %v877, 4
        %v879 = vadd.f32 %v877, %v878
        %v880 = vrot.slane %v879, 2
        %v881 = vadd.f32 %v879, %v880
        %v882 = vrot.slane %v881, 1
        %v883 = vadd.f32 %v881, %v882
        %v884 = vsel %vm508, %v746, 0.0
        %v885 = vsel %vm508, %v748, 0.0
        %v886 = vadd.f32 %v884, %v885
        %v887 = vrot.slane %v886, 4
        %v888 = vadd.f32 %v886, %v887
        %v889 = vrot.slane %v888, 2
        %v890 = vadd.f32 %v888, %v889
        %v891 = vrot.slane %v890, 1
        %v892 = vadd.f32 %v890, %v891
        %v893 = vrcp.pop %v757
        %v894 = vrcp.pop %v766
        %v895 = vrcp.pop %v775
        %v896 = vrcp.pop %v784
        %v897 = vrcp.pop %v793
        %v898 = vrcp.pop %v802
        %v899 = vrcp.pop %v811
        %v900 = vrcp.pop %v820
        %v901 = vrcp.pop %v829
        %v902 = vrcp.pop %v838
        %v903 = vrcp.pop %v847
        %v904 = vrcp.pop %v856
        %v905 = vrcp.pop %v865
        %v906 = vrcp.pop %v874
        %v907 = vrcp.pop %v883
        %v908 = vrcp.pop %v892
        %v909 = vmul.f32 %v686, %v893
        %v910 = vmul.f32 %v688, %v893
        %v911 = vmul.f32 %v690, %v894
        %v912 = vmul.f32 %v692, %v894
        %v913 = vmul.f32 %v694, %v895
        %v914 = vmul.f32 %v696, %v895
        %v915 = vmul.f32 %v698, %v896
        %v916 = vmul.f32 %v700, %v896
        %v917 = vmul.f32 %v702, %v897
        %v918 = vmul.f32 %v704, %v897
        %v919 = vmul.f32 %v706, %v898
        %v920 = vmul.f32 %v708, %v898
        %v921 = vmul.f32 %v710, %v899
        %v922 = vmul.f32 %v712, %v899
        %v923 = vmul.f32 %v714, %v900
        %v924 = vmul.f32 %v716, %v900
        %v925 = vmul.f32 %v718, %v901
        %v926 = vmul.f32 %v720, %v901
        %v927 = vmul.f32 %v722, %v902
        %v928 = vmul.f32 %v724, %v902
        %v929 = vmul.f32 %v726, %v903
        %v930 = vmul.f32 %v728, %v903
        %v931 = vmul.f32 %v730, %v904
        %v932 = vmul.f32 %v732, %v904
        %v933 = vmul.f32 %v734, %v905
        %v934 = vmul.f32 %v736, %v905
        %v935 = vmul.f32 %v738, %v906
        %v936 = vmul.f32 %v740, %v906
        %v937 = vmul.f32 %v742, %v907
        %v938 = vmul.f32 %v744, %v907
        %v939 = vmul.f32 %v746, %v908
        %v940 = vmul.f32 %v748, %v908
        %v941 = vpack.c.bf16 %v909, %v909
        %v942 = vpack.c.bf16 %v910, %v910
        %v943 = vpack.c.bf16 %v911, %v911
        %v944 = vpack.c.bf16 %v912, %v912
        %v945 = vpack.c.bf16 %v913, %v913
        %v946 = vpack.c.bf16 %v914, %v914
        %v947 = vpack.c.bf16 %v915, %v915
        %v948 = vpack.c.bf16 %v916, %v916
        %v949 = vpack.c.bf16 %v917, %v917
        %v950 = vpack.c.bf16 %v918, %v918
        %v951 = vpack.c.bf16 %v919, %v919
        %v952 = vpack.c.bf16 %v920, %v920
        %v953 = vpack.c.bf16 %v921, %v921
        %v954 = vpack.c.bf16 %v922, %v922
        %v955 = vpack.c.bf16 %v923, %v923
        %v956 = vpack.c.bf16 %v924, %v924
        %v957 = vpack.c.bf16 %v925, %v925
        %v958 = vpack.c.bf16 %v926, %v926
        %v959 = vpack.c.bf16 %v927, %v927
        %v960 = vpack.c.bf16 %v928, %v928
        %v961 = vpack.c.bf16 %v929, %v929
        %v962 = vpack.c.bf16 %v930, %v930
        %v963 = vpack.c.bf16 %v931, %v931
        %v964 = vpack.c.bf16 %v932, %v932
        %v965 = vpack.c.bf16 %v933, %v933
        %v966 = vpack.c.bf16 %v934, %v934
        %v967 = vpack.c.bf16 %v935, %v935
        %v968 = vpack.c.bf16 %v936, %v936
        %v969 = vpack.c.bf16 %v937, %v937
        %v970 = vpack.c.bf16 %v938, %v938
        %v971 = vpack.c.bf16 %v939, %v939
        %v972 = vpack.c.bf16 %v940, %v940
        %v973 = vpack.c.bf16 %v476, %v476
        %v974 = vpack.c.bf16 %v477, %v477
        %v975 = vpack.c.bf16 %v478, %v478
        %v976 = vpack.c.bf16 %v479, %v479
        %v977 = vpack.c.bf16 %v480, %v480
        %v978 = vpack.c.bf16 %v481, %v481
        %v979 = vpack.c.bf16 %v482, %v482
        %v980 = vpack.c.bf16 %v483, %v483
        %v981 = vpack.c.bf16 %v484, %v484
        %v982 = vpack.c.bf16 %v485, %v485
        %v983 = vpack.c.bf16 %v486, %v486
        %v984 = vpack.c.bf16 %v487, %v487
        %v985 = vpack.c.bf16 %v488, %v488
        %v986 = vpack.c.bf16 %v489, %v489
        %v987 = vpack.c.bf16 %v490, %v490
        %v988 = vpack.c.bf16 %v491, %v491
        %v989 = vpack.c.bf16 %v492, %v492
        %v990 = vpack.c.bf16 %v493, %v493
        %v991 = vpack.c.bf16 %v494, %v494
        %v992 = vpack.c.bf16 %v495, %v495
        %v993 = vpack.c.bf16 %v496, %v496
        %v994 = vpack.c.bf16 %v497, %v497
        %v995 = vpack.c.bf16 %v498, %v498
        %v996 = vpack.c.bf16 %v499, %v499
        %v997 = vpack.c.bf16 %v500, %v500
        %v998 = vpack.c.bf16 %v501, %v501
        %v999 = vpack.c.bf16 %v502, %v502
        %v1000 = vpack.c.bf16 %v503, %v503
        %v1001 = vpack.c.bf16 %v504, %v504
        %v1002 = vpack.c.bf16 %v505, %v505
        %v1003 = vpack.c.bf16 %v506, %v506
        %v1004 = vpack.c.bf16 %v507, %v507
        %v1007 = vunpack.c.l.b16 %v941
        %v1008 = vunpack.c.l.b16 %v942
        %v1009 = vpack.c.b16 %v1008, %v1007
        %1011 = vxpose.xlu0.c.b16.start [1/8] %v1009, 128
        %1012 = vxpose.xlu0.c.b16.cont [2/8] 0, 128
        %1013 = vxpose.xlu0.c.b16.cont [3/8] 0, 128
        %1014 = vxpose.xlu0.c.b16.cont [4/8] 0, 128
        %1015 = vxpose.xlu0.c.b16.cont [5/8] 0, 128
        %1016 = vxpose.xlu0.c.b16.cont [6/8] 0, 128
        %1017 = vxpose.xlu0.c.b16.cont [7/8] 0, 128
        %1018 = vxpose.xlu0.c.b16.end [8/8] 0, 128
        %v1019 = vpop.trf.xlu0
        %v1020 = vpop.trf.xlu0
        %v1021 = vpop.trf.xlu0
        %v1022 = vpop.trf.xlu0
        %v1023 = vpop.trf.xlu0
        %v1024 = vpop.trf.xlu0
        %v1025 = vpop.trf.xlu0
        %v1026 = vpop.trf.xlu0
        %v1029 = vunpack.c.l.b16 %v973
        %v1030 = vunpack.c.l.b16 %v974
        %v1031 = vpack.c.b16 %v1030, %v1029
        %vm1033 = vcmask 130048
        %v1035 = vsel %vm1033, %v1019, 0
        %v1038 = vsel %vm1033, %v1020, 0
        %1040 = vmatpush.bf16.msra.mxu0 0
        %1041 = vmatpush.bf16.msra.mxu0 0
        %1042 = vmatpush.bf16.msra.mxu0 0
        %1043 = vmatpush.bf16.msra.mxu0 0
        %1044 = vmatpush.bf16.msra.mxu0 0
        %1045 = vmatpush.bf16.msra.mxu0 0
        %1046 = vmatpush.bf16.msra.mxu0 0
        %1047 = vmatpush.bf16.msra.mxu0 %v1031
        %1048 = vmatmul.bf16.gmra.mxu0 %v1035
        %v1049 = vpop.f32.mrf.mxu0
        %v1050 = vadd.f32 0.0, %v1049
        %v1051 = vpop.f32.mrf.mxu0
        %v1052 = vadd.f32 0.0, %v1051
        %1053 = vmatmul.bf16.gmra.mxu0 %v1038
        %v1054 = vpop.f32.mrf.mxu0
        %v1055 = vadd.f32 0.0, %v1054
        %v1056 = vpop.f32.mrf.mxu0
        %v1057 = vadd.f32 0.0, %v1056
        %1058 = vdwg.mxu0
        %v1061 = vunpack.c.l.b16 %v943
        %v1062 = vunpack.c.l.b16 %v944
        %v1063 = vpack.c.b16 %v1062, %v1061
        %1065 = vxpose.xlu0.c.b16.start [1/8] %v1063, 128
        %1066 = vxpose.xlu0.c.b16.cont [2/8] 0, 128
        %1067 = vxpose.xlu0.c.b16.cont [3/8] 0, 128
        %1068 = vxpose.xlu0.c.b16.cont [4/8] 0, 128
        %1069 = vxpose.xlu0.c.b16.cont [5/8] 0, 128
        %1070 = vxpose.xlu0.c.b16.cont [6/8] 0, 128
        %1071 = vxpose.xlu0.c.b16.cont [7/8] 0, 128
        %1072 = vxpose.xlu0.c.b16.end [8/8] 0, 128
        %v1073 = vpop.trf.xlu0
        %v1074 = vpop.trf.xlu0
        %v1075 = vpop.trf.xlu0
        %v1076 = vpop.trf.xlu0
        %v1077 = vpop.trf.xlu0
        %v1078 = vpop.trf.xlu0
        %v1079 = vpop.trf.xlu0
        %v1080 = vpop.trf.xlu0
        %v1083 = vunpack.c.l.b16 %v975
        %v1084 = vunpack.c.l.b16 %v976
        %v1085 = vpack.c.b16 %v1084, %v1083
        %v1088 = vsel %vm1033, %v1073, 0
        %v1091 = vsel %vm1033, %v1074, 0
        %1093 = vmatpush.bf16.msra.mxu0 0
        %1094 = vmatpush.bf16.msra.mxu0 0
        %1095 = vmatpush.bf16.msra.mxu0 0
        %1096 = vmatpush.bf16.msra.mxu0 0
        %1097 = vmatpush.bf16.msra.mxu0 0
        %1098 = vmatpush.bf16.msra.mxu0 0
        %1099 = vmatpush.bf16.msra.mxu0 0
        %1100 = vmatpush.bf16.msra.mxu0 %v1085
        %1101 = vmatmul.bf16.gmra.mxu0 %v1088
        %v1102 = vpop.f32.mrf.mxu0
        %v1103 = vadd.f32 0.0, %v1102
        %v1104 = vpop.f32.mrf.mxu0
        %v1105 = vadd.f32 0.0, %v1104
        %1106 = vmatmul.bf16.gmra.mxu0 %v1091
        %v1107 = vpop.f32.mrf.mxu0
        %v1108 = vadd.f32 0.0, %v1107
        %v1109 = vpop.f32.mrf.mxu0
        %v1110 = vadd.f32 0.0, %v1109
        %1111 = vdwg.mxu0
        %v1114 = vunpack.c.l.b16 %v945
        %v1115 = vunpack.c.l.b16 %v946
        %v1116 = vpack.c.b16 %v1115, %v1114
        %1118 = vxpose.xlu0.c.b16.start [1/8] %v1116, 128
        %1119 = vxpose.xlu0.c.b16.cont [2/8] 0, 128
        %1120 = vxpose.xlu0.c.b16.cont [3/8] 0, 128
        %1121 = vxpose.xlu0.c.b16.cont [4/8] 0, 128
        %1122 = vxpose.xlu0.c.b16.cont [5/8] 0, 128
        %1123 = vxpose.xlu0.c.b16.cont [6/8] 0, 128
        %1124 = vxpose.xlu0.c.b16.cont [7/8] 0, 128
        %1125 = vxpose.xlu0.c.b16.end [8/8] 0, 128
        %v1126 = vpop.trf.xlu0
        %v1127 = vpop.trf.xlu0
        %v1128 = vpop.trf.xlu0
        %v1129 = vpop.trf.xlu0
        %v1130 = vpop.trf.xlu0
        %v1131 = vpop.trf.xlu0
        %v1132 = vpop.trf.xlu0
        %v1133 = vpop.trf.xlu0
        %v1136 = vunpack.c.l.b16 %v977
        %v1137 = vunpack.c.l.b16 %v978
        %v1138 = vpack.c.b16 %v1137, %v1136
        %v1141 = vsel %vm1033, %v1126, 0
        %v1144 = vsel %vm1033, %v1127, 0
        %1146 = vmatpush.bf16.msra.mxu0 0
        %1147 = vmatpush.bf16.msra.mxu0 0
        %1148 = vmatpush.bf16.msra.mxu0 0
        %1149 = vmatpush.bf16.msra.mxu0 0
        %1150 = vmatpush.bf16.msra.mxu0 0
        %1151 = vmatpush.bf16.msra.mxu0 0
        %1152 = vmatpush.bf16.msra.mxu0 0
        %1153 = vmatpush.bf16.msra.mxu0 %v1138
        %1154 = vmatmul.bf16.gmra.mxu0 %v1141
        %v1155 = vpop.f32.mrf.mxu0
        %v1156 = vadd.f32 0.0, %v1155
        %v1157 = vpop.f32.mrf.mxu0
        %v1158 = vadd.f32 0.0, %v1157
        %1159 = vmatmul.bf16.gmra.mxu0 %v1144
        %v1160 = vpop.f32.mrf.mxu0
        %v1161 = vadd.f32 0.0, %v1160
        %v1162 = vpop.f32.mrf.mxu0
        %v1163 = vadd.f32 0.0, %v1162
        %1164 = vdwg.mxu0
        %v1167 = vunpack.c.l.b16 %v947
        %v1168 = vunpack.c.l.b16 %v948
        %v1169 = vpack.c.b16 %v1168, %v1167
        %1171 = vxpose.xlu0.c.b16.start [1/8] %v1169, 128
        %1172 = vxpose.xlu0.c.b16.cont [2/8] 0, 128
        %1173 = vxpose.xlu0.c.b16.cont [3/8] 0, 128
        %1174 = vxpose.xlu0.c.b16.cont [4/8] 0, 128
        %1175 = vxpose.xlu0.c.b16.cont [5/8] 0, 128
        %1176 = vxpose.xlu0.c.b16.cont [6/8] 0, 128
        %1177 = vxpose.xlu0.c.b16.cont [7/8] 0, 128
        %1178 = vxpose.xlu0.c.b16.end [8/8] 0, 128
        %v1179 = vpop.trf.xlu0
        %v1180 = vpop.trf.xlu0
        %v1181 = vpop.trf.xlu0
        %v1182 = vpop.trf.xlu0
        %v1183 = vpop.trf.xlu0
        %v1184 = vpop.trf.xlu0
        %v1185 = vpop.trf.xlu0
        %v1186 = vpop.trf.xlu0
        %v1189 = vunpack.c.l.b16 %v979
        %v1190 = vunpack.c.l.b16 %v980
        %v1191 = vpack.c.b16 %v1190, %v1189
        %v1194 = vsel %vm1033, %v1179, 0
        %v1197 = vsel %vm1033, %v1180, 0
        %1199 = vmatpush.bf16.msra.mxu0 0
        %1200 = vmatpush.bf16.msra.mxu0 0
        %1201 = vmatpush.bf16.msra.mxu0 0
        %1202 = vmatpush.bf16.msra.mxu0 0
        %1203 = vmatpush.bf16.msra.mxu0 0
        %1204 = vmatpush.bf16.msra.mxu0 0
        %1205 = vmatpush.bf16.msra.mxu0 0
        %1206 = vmatpush.bf16.msra.mxu0 %v1191
        %1207 = vmatmul.bf16.gmra.mxu0 %v1194
        %v1208 = vpop.f32.mrf.mxu0
        %v1209 = vadd.f32 0.0, %v1208
        %v1210 = vpop.f32.mrf.mxu0
        %v1211 = vadd.f32 0.0, %v1210
        %1212 = vmatmul.bf16.gmra.mxu0 %v1197
        %v1213 = vpop.f32.mrf.mxu0
        %v1214 = vadd.f32 0.0, %v1213
        %v1215 = vpop.f32.mrf.mxu0
        %v1216 = vadd.f32 0.0, %v1215
        %1217 = vdwg.mxu0
        %v1220 = vunpack.c.l.b16 %v949
        %v1221 = vunpack.c.l.b16 %v950
        %v1222 = vpack.c.b16 %v1221, %v1220
        %1224 = vxpose.xlu0.c.b16.start [1/8] %v1222, 128
        %1225 = vxpose.xlu0.c.b16.cont [2/8] 0, 128
        %1226 = vxpose.xlu0.c.b16.cont [3/8] 0, 128
        %1227 = vxpose.xlu0.c.b16.cont [4/8] 0, 128
        %1228 = vxpose.xlu0.c.b16.cont [5/8] 0, 128
        %1229 = vxpose.xlu0.c.b16.cont [6/8] 0, 128
        %1230 = vxpose.xlu0.c.b16.cont [7/8] 0, 128
        %1231 = vxpose.xlu0.c.b16.end [8/8] 0, 128
        %v1232 = vpop.trf.xlu0
        %v1233 = vpop.trf.xlu0
        %v1234 = vpop.trf.xlu0
        %v1235 = vpop.trf.xlu0
        %v1236 = vpop.trf.xlu0
        %v1237 = vpop.trf.xlu0
        %v1238 = vpop.trf.xlu0
        %v1239 = vpop.trf.xlu0
        %v1242 = vunpack.c.l.b16 %v981
        %v1243 = vunpack.c.l.b16 %v982
        %v1244 = vpack.c.b16 %v1243, %v1242
        %v1247 = vsel %vm1033, %v1232, 0
        %v1250 = vsel %vm1033, %v1233, 0
        %1252 = vmatpush.bf16.msra.mxu0 0
        %1253 = vmatpush.bf16.msra.mxu0 0
        %1254 = vmatpush.bf16.msra.mxu0 0
        %1255 = vmatpush.bf16.msra.mxu0 0
        %1256 = vmatpush.bf16.msra.mxu0 0
        %1257 = vmatpush.bf16.msra.mxu0 0
        %1258 = vmatpush.bf16.msra.mxu0 0
        %1259 = vmatpush.bf16.msra.mxu0 %v1244
        %1260 = vmatmul.bf16.gmra.mxu0 %v1247
        %v1261 = vpop.f32.mrf.mxu0
        %v1262 = vadd.f32 0.0, %v1261
        %v1263 = vpop.f32.mrf.mxu0
        %v1264 = vadd.f32 0.0, %v1263
        %1265 = vmatmul.bf16.gmra.mxu0 %v1250
        %v1266 = vpop.f32.mrf.mxu0
        %v1267 = vadd.f32 0.0, %v1266
        %v1268 = vpop.f32.mrf.mxu0
        %v1269 = vadd.f32 0.0, %v1268
        %1270 = vdwg.mxu0
        %v1273 = vunpack.c.l.b16 %v951
        %v1274 = vunpack.c.l.b16 %v952
        %v1275 = vpack.c.b16 %v1274, %v1273
        %1277 = vxpose.xlu0.c.b16.start [1/8] %v1275, 128
        %1278 = vxpose.xlu0.c.b16.cont [2/8] 0, 128
        %1279 = vxpose.xlu0.c.b16.cont [3/8] 0, 128
        %1280 = vxpose.xlu0.c.b16.cont [4/8] 0, 128
        %1281 = vxpose.xlu0.c.b16.cont [5/8] 0, 128
        %1282 = vxpose.xlu0.c.b16.cont [6/8] 0, 128
        %1283 = vxpose.xlu0.c.b16.cont [7/8] 0, 128
        %1284 = vxpose.xlu0.c.b16.end [8/8] 0, 128
        %v1285 = vpop.trf.xlu0
        %v1286 = vpop.trf.xlu0
        %v1287 = vpop.trf.xlu0
        %v1288 = vpop.trf.xlu0
        %v1289 = vpop.trf.xlu0
        %v1290 = vpop.trf.xlu0
        %v1291 = vpop.trf.xlu0
        %v1292 = vpop.trf.xlu0
        %v1295 = vunpack.c.l.b16 %v983
        %v1296 = vunpack.c.l.b16 %v984
        %v1297 = vpack.c.b16 %v1296, %v1295
        %v1300 = vsel %vm1033, %v1285, 0
        %v1303 = vsel %vm1033, %v1286, 0
        %1305 = vmatpush.bf16.msra.mxu0 0
        %1306 = vmatpush.bf16.msra.mxu0 0
        %1307 = vmatpush.bf16.msra.mxu0 0
        %1308 = vmatpush.bf16.msra.mxu0 0
        %1309 = vmatpush.bf16.msra.mxu0 0
        %1310 = vmatpush.bf16.msra.mxu0 0
        %1311 = vmatpush.bf16.msra.mxu0 0
        %1312 = vmatpush.bf16.msra.mxu0 %v1297
        %1313 = vmatmul.bf16.gmra.mxu0 %v1300
        %v1314 = vpop.f32.mrf.mxu0
        %v1315 = vadd.f32 0.0, %v1314
        %v1316 = vpop.f32.mrf.mxu0
        %v1317 = vadd.f32 0.0, %v1316
        %1318 = vmatmul.bf16.gmra.mxu0 %v1303
        %v1319 = vpop.f32.mrf.mxu0
        %v1320 = vadd.f32 0.0, %v1319
        %v1321 = vpop.f32.mrf.mxu0
        %v1322 = vadd.f32 0.0, %v1321
        %1323 = vdwg.mxu0
        %v1326 = vunpack.c.l.b16 %v953
        %v1327 = vunpack.c.l.b16 %v954
        %v1328 = vpack.c.b16 %v1327, %v1326
        %1330 = vxpose.xlu0.c.b16.start [1/8] %v1328, 128
        %1331 = vxpose.xlu0.c.b16.cont [2/8] 0, 128
        %1332 = vxpose.xlu0.c.b16.cont [3/8] 0, 128
        %1333 = vxpose.xlu0.c.b16.cont [4/8] 0, 128
        %1334 = vxpose.xlu0.c.b16.cont [5/8] 0, 128
        %1335 = vxpose.xlu0.c.b16.cont [6/8] 0, 128
        %1336 = vxpose.xlu0.c.b16.cont [7/8] 0, 128
        %1337 = vxpose.xlu0.c.b16.end [8/8] 0, 128
        %v1338 = vpop.trf.xlu0
        %v1339 = vpop.trf.xlu0
        %v1340 = vpop.trf.xlu0
        %v1341 = vpop.trf.xlu0
        %v1342 = vpop.trf.xlu0
        %v1343 = vpop.trf.xlu0
        %v1344 = vpop.trf.xlu0
        %v1345 = vpop.trf.xlu0
        %v1348 = vunpack.c.l.b16 %v985
        %v1349 = vunpack.c.l.b16 %v986
        %v1350 = vpack.c.b16 %v1349, %v1348
        %v1353 = vsel %vm1033, %v1338, 0
        %v1356 = vsel %vm1033, %v1339, 0
        %1358 = vmatpush.bf16.msra.mxu0 0
        %1359 = vmatpush.bf16.msra.mxu0 0
        %1360 = vmatpush.bf16.msra.mxu0 0
        %1361 = vmatpush.bf16.msra.mxu0 0
        %1362 = vmatpush.bf16.msra.mxu0 0
        %1363 = vmatpush.bf16.msra.mxu0 0
        %1364 = vmatpush.bf16.msra.mxu0 0
        %1365 = vmatpush.bf16.msra.mxu0 %v1350
        %1366 = vmatmul.bf16.gmra.mxu0 %v1353
        %v1367 = vpop.f32.mrf.mxu0
        %v1368 = vadd.f32 0.0, %v1367
        %v1369 = vpop.f32.mrf.mxu0
        %v1370 = vadd.f32 0.0, %v1369
        %1371 = vmatmul.bf16.gmra.mxu0 %v1356
        %v1372 = vpop.f32.mrf.mxu0
        %v1373 = vadd.f32 0.0, %v1372
        %v1374 = vpop.f32.mrf.mxu0
        %v1375 = vadd.f32 0.0, %v1374
        %1376 = vdwg.mxu0
        %v1379 = vunpack.c.l.b16 %v955
        %v1380 = vunpack.c.l.b16 %v956
        %v1381 = vpack.c.b16 %v1380, %v1379
        %1383 = vxpose.xlu0.c.b16.start [1/8] %v1381, 128
        %1384 = vxpose.xlu0.c.b16.cont [2/8] 0, 128
        %1385 = vxpose.xlu0.c.b16.cont [3/8] 0, 128
        %1386 = vxpose.xlu0.c.b16.cont [4/8] 0, 128
        %1387 = vxpose.xlu0.c.b16.cont [5/8] 0, 128
        %1388 = vxpose.xlu0.c.b16.cont [6/8] 0, 128
        %1389 = vxpose.xlu0.c.b16.cont [7/8] 0, 128
        %1390 = vxpose.xlu0.c.b16.end [8/8] 0, 128
        %v1391 = vpop.trf.xlu0
        %v1392 = vpop.trf.xlu0
        %v1393 = vpop.trf.xlu0
        %v1394 = vpop.trf.xlu0
        %v1395 = vpop.trf.xlu0
        %v1396 = vpop.trf.xlu0
        %v1397 = vpop.trf.xlu0
        %v1398 = vpop.trf.xlu0
        %v1401 = vunpack.c.l.b16 %v987
        %v1402 = vunpack.c.l.b16 %v988
        %v1403 = vpack.c.b16 %v1402, %v1401
        %v1406 = vsel %vm1033, %v1391, 0
        %v1409 = vsel %vm1033, %v1392, 0
        %1411 = vmatpush.bf16.msra.mxu0 0
        %1412 = vmatpush.bf16.msra.mxu0 0
        %1413 = vmatpush.bf16.msra.mxu0 0
        %1414 = vmatpush.bf16.msra.mxu0 0
        %1415 = vmatpush.bf16.msra.mxu0 0
        %1416 = vmatpush.bf16.msra.mxu0 0
        %1417 = vmatpush.bf16.msra.mxu0 0
        %1418 = vmatpush.bf16.msra.mxu0 %v1403
        %1419 = vmatmul.bf16.gmra.mxu0 %v1406
        %v1420 = vpop.f32.mrf.mxu0
        %v1421 = vadd.f32 0.0, %v1420
        %v1422 = vpop.f32.mrf.mxu0
        %v1423 = vadd.f32 0.0, %v1422
        %1424 = vmatmul.bf16.gmra.mxu0 %v1409
        %v1425 = vpop.f32.mrf.mxu0
        %v1426 = vadd.f32 0.0, %v1425
        %v1427 = vpop.f32.mrf.mxu0
        %v1428 = vadd.f32 0.0, %v1427
        %1429 = vdwg.mxu0
        %v1432 = vunpack.c.l.b16 %v957
        %v1433 = vunpack.c.l.b16 %v958
        %v1434 = vpack.c.b16 %v1433, %v1432
        %1436 = vxpose.xlu0.c.b16.start [1/8] %v1434, 128
        %1437 = vxpose.xlu0.c.b16.cont [2/8] 0, 128
        %1438 = vxpose.xlu0.c.b16.cont [3/8] 0, 128
        %1439 = vxpose.xlu0.c.b16.cont [4/8] 0, 128
        %1440 = vxpose.xlu0.c.b16.cont [5/8] 0, 128
        %1441 = vxpose.xlu0.c.b16.cont [6/8] 0, 128
        %1442 = vxpose.xlu0.c.b16.cont [7/8] 0, 128
        %1443 = vxpose.xlu0.c.b16.end [8/8] 0, 128
        %v1444 = vpop.trf.xlu0
        %v1445 = vpop.trf.xlu0
        %v1446 = vpop.trf.xlu0
        %v1447 = vpop.trf.xlu0
        %v1448 = vpop.trf.xlu0
        %v1449 = vpop.trf.xlu0
        %v1450 = vpop.trf.xlu0
        %v1451 = vpop.trf.xlu0
        %v1454 = vunpack.c.l.b16 %v989
        %v1455 = vunpack.c.l.b16 %v990
        %v1456 = vpack.c.b16 %v1455, %v1454
        %v1459 = vsel %vm1033, %v1444, 0
        %v1462 = vsel %vm1033, %v1445, 0
        %1464 = vmatpush.bf16.msra.mxu0 0
        %1465 = vmatpush.bf16.msra.mxu0 0
        %1466 = vmatpush.bf16.msra.mxu0 0
        %1467 = vmatpush.bf16.msra.mxu0 0
        %1468 = vmatpush.bf16.msra.mxu0 0
        %1469 = vmatpush.bf16.msra.mxu0 0
        %1470 = vmatpush.bf16.msra.mxu0 0
        %1471 = vmatpush.bf16.msra.mxu0 %v1456
        %1472 = vmatmul.bf16.gmra.mxu0 %v1459
        %v1473 = vpop.f32.mrf.mxu0
        %v1474 = vadd.f32 0.0, %v1473
        %v1475 = vpop.f32.mrf.mxu0
        %v1476 = vadd.f32 0.0, %v1475
        %1477 = vmatmul.bf16.gmra.mxu0 %v1462
        %v1478 = vpop.f32.mrf.mxu0
        %v1479 = vadd.f32 0.0, %v1478
        %v1480 = vpop.f32.mrf.mxu0
        %v1481 = vadd.f32 0.0, %v1480
        %1482 = vdwg.mxu0
        %v1485 = vunpack.c.l.b16 %v959
        %v1486 = vunpack.c.l.b16 %v960
        %v1487 = vpack.c.b16 %v1486, %v1485
        %1489 = vxpose.xlu0.c.b16.start [1/8] %v1487, 128
        %1490 = vxpose.xlu0.c.b16.cont [2/8] 0, 128
        %1491 = vxpose.xlu0.c.b16.cont [3/8] 0, 128
        %1492 = vxpose.xlu0.c.b16.cont [4/8] 0, 128
        %1493 = vxpose.xlu0.c.b16.cont [5/8] 0, 128
        %1494 = vxpose.xlu0.c.b16.cont [6/8] 0, 128
        %1495 = vxpose.xlu0.c.b16.cont [7/8] 0, 128
        %1496 = vxpose.xlu0.c.b16.end [8/8] 0, 128
        %v1497 = vpop.trf.xlu0
        %v1498 = vpop.trf.xlu0
        %v1499 = vpop.trf.xlu0
        %v1500 = vpop.trf.xlu0
        %v1501 = vpop.trf.xlu0
        %v1502 = vpop.trf.xlu0
        %v1503 = vpop.trf.xlu0
        %v1504 = vpop.trf.xlu0
        %v1507 = vunpack.c.l.b16 %v991
        %v1508 = vunpack.c.l.b16 %v992
        %v1509 = vpack.c.b16 %v1508, %v1507
        %v1512 = vsel %vm1033, %v1497, 0
        %v1515 = vsel %vm1033, %v1498, 0
        %1517 = vmatpush.bf16.msra.mxu0 0
        %1518 = vmatpush.bf16.msra.mxu0 0
        %1519 = vmatpush.bf16.msra.mxu0 0
        %1520 = vmatpush.bf16.msra.mxu0 0
        %1521 = vmatpush.bf16.msra.mxu0 0
        %1522 = vmatpush.bf16.msra.mxu0 0
        %1523 = vmatpush.bf16.msra.mxu0 0
        %1524 = vmatpush.bf16.msra.mxu0 %v1509
        %1525 = vmatmul.bf16.gmra.mxu0 %v1512
        %v1526 = vpop.f32.mrf.mxu0
        %v1527 = vadd.f32 0.0, %v1526
        %v1528 = vpop.f32.mrf.mxu0
        %v1529 = vadd.f32 0.0, %v1528
        %1530 = vmatmul.bf16.gmra.mxu0 %v1515
        %v1531 = vpop.f32.mrf.mxu0
        %v1532 = vadd.f32 0.0, %v1531
        %v1533 = vpop.f32.mrf.mxu0
        %v1534 = vadd.f32 0.0, %v1533
        %1535 = vdwg.mxu0
        %v1538 = vunpack.c.l.b16 %v961
        %v1539 = vunpack.c.l.b16 %v962
        %v1540 = vpack.c.b16 %v1539, %v1538
        %1542 = vxpose.xlu0.c.b16.start [1/8] %v1540, 128
        %1543 = vxpose.xlu0.c.b16.cont [2/8] 0, 128
        %1544 = vxpose.xlu0.c.b16.cont [3/8] 0, 128
        %1545 = vxpose.xlu0.c.b16.cont [4/8] 0, 128
        %1546 = vxpose.xlu0.c.b16.cont [5/8] 0, 128
        %1547 = vxpose.xlu0.c.b16.cont [6/8] 0, 128
        %1548 = vxpose.xlu0.c.b16.cont [7/8] 0, 128
        %1549 = vxpose.xlu0.c.b16.end [8/8] 0, 128
        %v1550 = vpop.trf.xlu0
        %v1551 = vpop.trf.xlu0
        %v1552 = vpop.trf.xlu0
        %v1553 = vpop.trf.xlu0
        %v1554 = vpop.trf.xlu0
        %v1555 = vpop.trf.xlu0
        %v1556 = vpop.trf.xlu0
        %v1557 = vpop.trf.xlu0
        %v1560 = vunpack.c.l.b16 %v993
        %v1561 = vunpack.c.l.b16 %v994
        %v1562 = vpack.c.b16 %v1561, %v1560
        %v1565 = vsel %vm1033, %v1550, 0
        %v1568 = vsel %vm1033, %v1551, 0
        %1570 = vmatpush.bf16.msra.mxu0 0
        %1571 = vmatpush.bf16.msra.mxu0 0
        %1572 = vmatpush.bf16.msra.mxu0 0
        %1573 = vmatpush.bf16.msra.mxu0 0
        %1574 = vmatpush.bf16.msra.mxu0 0
        %1575 = vmatpush.bf16.msra.mxu0 0
        %1576 = vmatpush.bf16.msra.mxu0 0
        %1577 = vmatpush.bf16.msra.mxu0 %v1562
        %1578 = vmatmul.bf16.gmra.mxu0 %v1565
        %v1579 = vpop.f32.mrf.mxu0
        %v1580 = vadd.f32 0.0, %v1579
        %v1581 = vpop.f32.mrf.mxu0
        %v1582 = vadd.f32 0.0, %v1581
        %1583 = vmatmul.bf16.gmra.mxu0 %v1568
        %v1584 = vpop.f32.mrf.mxu0
        %v1585 = vadd.f32 0.0, %v1584
        %v1586 = vpop.f32.mrf.mxu0
        %v1587 = vadd.f32 0.0, %v1586
        %1588 = vdwg.mxu0
        %v1591 = vunpack.c.l.b16 %v963
        %v1592 = vunpack.c.l.b16 %v964
        %v1593 = vpack.c.b16 %v1592, %v1591
        %1595 = vxpose.xlu0.c.b16.start [1/8] %v1593, 128
        %1596 = vxpose.xlu0.c.b16.cont [2/8] 0, 128
        %1597 = vxpose.xlu0.c.b16.cont [3/8] 0, 128
        %1598 = vxpose.xlu0.c.b16.cont [4/8] 0, 128
        %1599 = vxpose.xlu0.c.b16.cont [5/8] 0, 128
        %1600 = vxpose.xlu0.c.b16.cont [6/8] 0, 128
        %1601 = vxpose.xlu0.c.b16.cont [7/8] 0, 128
        %1602 = vxpose.xlu0.c.b16.end [8/8] 0, 128
        %v1603 = vpop.trf.xlu0
        %v1604 = vpop.trf.xlu0
        %v1605 = vpop.trf.xlu0
        %v1606 = vpop.trf.xlu0
        %v1607 = vpop.trf.xlu0
        %v1608 = vpop.trf.xlu0
        %v1609 = vpop.trf.xlu0
        %v1610 = vpop.trf.xlu0
        %v1613 = vunpack.c.l.b16 %v995
        %v1614 = vunpack.c.l.b16 %v996
        %v1615 = vpack.c.b16 %v1614, %v1613
        %v1618 = vsel %vm1033, %v1603, 0
        %v1621 = vsel %vm1033, %v1604, 0
        %1623 = vmatpush.bf16.msra.mxu0 0
        %1624 = vmatpush.bf16.msra.mxu0 0
        %1625 = vmatpush.bf16.msra.mxu0 0
        %1626 = vmatpush.bf16.msra.mxu0 0
        %1627 = vmatpush.bf16.msra.mxu0 0
        %1628 = vmatpush.bf16.msra.mxu0 0
        %1629 = vmatpush.bf16.msra.mxu0 0
        %1630 = vmatpush.bf16.msra.mxu0 %v1615
        %1631 = vmatmul.bf16.gmra.mxu0 %v1618
        %v1632 = vpop.f32.mrf.mxu0
        %v1633 = vadd.f32 0.0, %v1632
        %v1634 = vpop.f32.mrf.mxu0
        %v1635 = vadd.f32 0.0, %v1634
        %1636 = vmatmul.bf16.gmra.mxu0 %v1621
        %v1637 = vpop.f32.mrf.mxu0
        %v1638 = vadd.f32 0.0, %v1637
        %v1639 = vpop.f32.mrf.mxu0
        %v1640 = vadd.f32 0.0, %v1639
        %1641 = vdwg.mxu0
        %v1644 = vunpack.c.l.b16 %v965
        %v1645 = vunpack.c.l.b16 %v966
        %v1646 = vpack.c.b16 %v1645, %v1644
        %1648 = vxpose.xlu0.c.b16.start [1/8] %v1646, 128
        %1649 = vxpose.xlu0.c.b16.cont [2/8] 0, 128
        %1650 = vxpose.xlu0.c.b16.cont [3/8] 0, 128
        %1651 = vxpose.xlu0.c.b16.cont [4/8] 0, 128
        %1652 = vxpose.xlu0.c.b16.cont [5/8] 0, 128
        %1653 = vxpose.xlu0.c.b16.cont [6/8] 0, 128
        %1654 = vxpose.xlu0.c.b16.cont [7/8] 0, 128
        %1655 = vxpose.xlu0.c.b16.end [8/8] 0, 128
        %v1656 = vpop.trf.xlu0
        %v1657 = vpop.trf.xlu0
        %v1658 = vpop.trf.xlu0
        %v1659 = vpop.trf.xlu0
        %v1660 = vpop.trf.xlu0
        %v1661 = vpop.trf.xlu0
        %v1662 = vpop.trf.xlu0
        %v1663 = vpop.trf.xlu0
        %v1666 = vunpack.c.l.b16 %v997
        %v1667 = vunpack.c.l.b16 %v998
        %v1668 = vpack.c.b16 %v1667, %v1666
        %v1671 = vsel %vm1033, %v1656, 0
        %v1674 = vsel %vm1033, %v1657, 0
        %1676 = vmatpush.bf16.msra.mxu0 0
        %1677 = vmatpush.bf16.msra.mxu0 0
        %1678 = vmatpush.bf16.msra.mxu0 0
        %1679 = vmatpush.bf16.msra.mxu0 0
        %1680 = vmatpush.bf16.msra.mxu0 0
        %1681 = vmatpush.bf16.msra.mxu0 0
        %1682 = vmatpush.bf16.msra.mxu0 0
        %1683 = vmatpush.bf16.msra.mxu0 %v1668
        %1684 = vmatmul.bf16.gmra.mxu0 %v1671
        %v1685 = vpop.f32.mrf.mxu0
        %v1686 = vadd.f32 0.0, %v1685
        %v1687 = vpop.f32.mrf.mxu0
        %v1688 = vadd.f32 0.0, %v1687
        %1689 = vmatmul.bf16.gmra.mxu0 %v1674
        %v1690 = vpop.f32.mrf.mxu0
        %v1691 = vadd.f32 0.0, %v1690
        %v1692 = vpop.f32.mrf.mxu0
        %v1693 = vadd.f32 0.0, %v1692
        %1694 = vdwg.mxu0
        %v1697 = vunpack.c.l.b16 %v967
        %v1698 = vunpack.c.l.b16 %v968
        %v1699 = vpack.c.b16 %v1698, %v1697
        %1701 = vxpose.xlu0.c.b16.start [1/8] %v1699, 128
        %1702 = vxpose.xlu0.c.b16.cont [2/8] 0, 128
        %1703 = vxpose.xlu0.c.b16.cont [3/8] 0, 128
        %1704 = vxpose.xlu0.c.b16.cont [4/8] 0, 128
        %1705 = vxpose.xlu0.c.b16.cont [5/8] 0, 128
        %1706 = vxpose.xlu0.c.b16.cont [6/8] 0, 128
        %1707 = vxpose.xlu0.c.b16.cont [7/8] 0, 128
        %1708 = vxpose.xlu0.c.b16.end [8/8] 0, 128
        %v1709 = vpop.trf.xlu0
        %v1710 = vpop.trf.xlu0
        %v1711 = vpop.trf.xlu0
        %v1712 = vpop.trf.xlu0
        %v1713 = vpop.trf.xlu0
        %v1714 = vpop.trf.xlu0
        %v1715 = vpop.trf.xlu0
        %v1716 = vpop.trf.xlu0
        %v1719 = vunpack.c.l.b16 %v999
        %v1720 = vunpack.c.l.b16 %v1000
        %v1721 = vpack.c.b16 %v1720, %v1719
        %v1724 = vsel %vm1033, %v1709, 0
        %v1727 = vsel %vm1033, %v1710, 0
        %1729 = vmatpush.bf16.msra.mxu0 0
        %1730 = vmatpush.bf16.msra.mxu0 0
        %1731 = vmatpush.bf16.msra.mxu0 0
        %1732 = vmatpush.bf16.msra.mxu0 0
        %1733 = vmatpush.bf16.msra.mxu0 0
        %1734 = vmatpush.bf16.msra.mxu0 0
        %1735 = vmatpush.bf16.msra.mxu0 0
        %1736 = vmatpush.bf16.msra.mxu0 %v1721
        %1737 = vmatmul.bf16.gmra.mxu0 %v1724
        %v1738 = vpop.f32.mrf.mxu0
        %v1739 = vadd.f32 0.0, %v1738
        %v1740 = vpop.f32.mrf.mxu0
        %v1741 = vadd.f32 0.0, %v1740
        %1742 = vmatmul.bf16.gmra.mxu0 %v1727
        %v1743 = vpop.f32.mrf.mxu0
        %v1744 = vadd.f32 0.0, %v1743
        %v1745 = vpop.f32.mrf.mxu0
        %v1746 = vadd.f32 0.0, %v1745
        %1747 = vdwg.mxu0
        %v1750 = vunpack.c.l.b16 %v969
        %v1751 = vunpack.c.l.b16 %v970
        %v1752 = vpack.c.b16 %v1751, %v1750
        %1754 = vxpose.xlu0.c.b16.start [1/8] %v1752, 128
        %1755 = vxpose.xlu0.c.b16.cont [2/8] 0, 128
        %1756 = vxpose.xlu0.c.b16.cont [3/8] 0, 128
        %1757 = vxpose.xlu0.c.b16.cont [4/8] 0, 128
        %1758 = vxpose.xlu0.c.b16.cont [5/8] 0, 128
        %1759 = vxpose.xlu0.c.b16.cont [6/8] 0, 128
        %1760 = vxpose.xlu0.c.b16.cont [7/8] 0, 128
        %1761 = vxpose.xlu0.c.b16.end [8/8] 0, 128
        %v1762 = vpop.trf.xlu0
        %v1763 = vpop.trf.xlu0
        %v1764 = vpop.trf.xlu0
        %v1765 = vpop.trf.xlu0
        %v1766 = vpop.trf.xlu0
        %v1767 = vpop.trf.xlu0
        %v1768 = vpop.trf.xlu0
        %v1769 = vpop.trf.xlu0
        %v1772 = vunpack.c.l.b16 %v1001
        %v1773 = vunpack.c.l.b16 %v1002
        %v1774 = vpack.c.b16 %v1773, %v1772
        %v1777 = vsel %vm1033, %v1762, 0
        %v1780 = vsel %vm1033, %v1763, 0
        %1782 = vmatpush.bf16.msra.mxu0 0
        %1783 = vmatpush.bf16.msra.mxu0 0
        %1784 = vmatpush.bf16.msra.mxu0 0
        %1785 = vmatpush.bf16.msra.mxu0 0
        %1786 = vmatpush.bf16.msra.mxu0 0
        %1787 = vmatpush.bf16.msra.mxu0 0
        %1788 = vmatpush.bf16.msra.mxu0 0
        %1789 = vmatpush.bf16.msra.mxu0 %v1774
        %1790 = vmatmul.bf16.gmra.mxu0 %v1777
        %v1791 = vpop.f32.mrf.mxu0
        %v1792 = vadd.f32 0.0, %v1791
        %v1793 = vpop.f32.mrf.mxu0
        %v1794 = vadd.f32 0.0, %v1793
        %1795 = vmatmul.bf16.gmra.mxu0 %v1780
        %v1796 = vpop.f32.mrf.mxu0
        %v1797 = vadd.f32 0.0, %v1796
        %v1798 = vpop.f32.mrf.mxu0
        %v1799 = vadd.f32 0.0, %v1798
        %1800 = vdwg.mxu0
        %v1803 = vunpack.c.l.b16 %v971
        %v1804 = vunpack.c.l.b16 %v972
        %v1805 = vpack.c.b16 %v1804, %v1803
        %1807 = vxpose.xlu0.c.b16.start [1/8] %v1805, 128
        %1808 = vxpose.xlu0.c.b16.cont [2/8] 0, 128
        %1809 = vxpose.xlu0.c.b16.cont [3/8] 0, 128
        %1810 = vxpose.xlu0.c.b16.cont [4/8] 0, 128
        %1811 = vxpose.xlu0.c.b16.cont [5/8] 0, 128
        %1812 = vxpose.xlu0.c.b16.cont [6/8] 0, 128
        %1813 = vxpose.xlu0.c.b16.cont [7/8] 0, 128
        %1814 = vxpose.xlu0.c.b16.end [8/8] 0, 128
        %v1815 = vpop.trf.xlu0
        %v1816 = vpop.trf.xlu0
        %v1817 = vpop.trf.xlu0
        %v1818 = vpop.trf.xlu0
        %v1819 = vpop.trf.xlu0
        %v1820 = vpop.trf.xlu0
        %v1821 = vpop.trf.xlu0
        %v1822 = vpop.trf.xlu0
        %v1825 = vunpack.c.l.b16 %v1003
        %v1826 = vunpack.c.l.b16 %v1004
        %v1827 = vpack.c.b16 %v1826, %v1825
        %v1830 = vsel %vm1033, %v1815, 0
        %v1833 = vsel %vm1033, %v1816, 0
        %1835 = vmatpush.bf16.msra.mxu0 0
        %1836 = vmatpush.bf16.msra.mxu0 0
        %1837 = vmatpush.bf16.msra.mxu0 0
        %1838 = vmatpush.bf16.msra.mxu0 0
        %1839 = vmatpush.bf16.msra.mxu0 0
        %1840 = vmatpush.bf16.msra.mxu0 0
        %1841 = vmatpush.bf16.msra.mxu0 0
        %1842 = vmatpush.bf16.msra.mxu0 %v1827
        %1843 = vmatmul.bf16.gmra.mxu0 %v1830
        %v1844 = vpop.f32.mrf.mxu0
        %v1845 = vadd.f32 0.0, %v1844
        %v1846 = vpop.f32.mrf.mxu0
        %v1847 = vadd.f32 0.0, %v1846
        %1848 = vmatmul.bf16.gmra.mxu0 %v1833
        %v1849 = vpop.f32.mrf.mxu0
        %v1850 = vadd.f32 0.0, %v1849
        %v1851 = vpop.f32.mrf.mxu0
        %v1852 = vadd.f32 0.0, %v1851
        %1853 = vdwg.mxu0
        %v1854 = vpack.c.bf16 %v1050, %v1050
        %v1855 = vpack.c.bf16 %v1052, %v1052
        %v1856 = vpack.c.bf16 %v1055, %v1055
        %v1857 = vpack.c.bf16 %v1057, %v1057
        %v1858 = vpack.c.bf16 %v1103, %v1103
        %v1859 = vpack.c.bf16 %v1105, %v1105
        %v1860 = vpack.c.bf16 %v1108, %v1108
        %v1861 = vpack.c.bf16 %v1110, %v1110
        %v1862 = vpack.c.bf16 %v1156, %v1156
        %v1863 = vpack.c.bf16 %v1158, %v1158
        %v1864 = vpack.c.bf16 %v1161, %v1161
        %v1865 = vpack.c.bf16 %v1163, %v1163
        %v1866 = vpack.c.bf16 %v1209, %v1209
        %v1867 = vpack.c.bf16 %v1211, %v1211
        %v1868 = vpack.c.bf16 %v1214, %v1214
        %v1869 = vpack.c.bf16 %v1216, %v1216
        %v1870 = vpack.c.bf16 %v1262, %v1262
        %v1871 = vpack.c.bf16 %v1264, %v1264
        %v1872 = vpack.c.bf16 %v1267, %v1267
        %v1873 = vpack.c.bf16 %v1269, %v1269
        %v1874 = vpack.c.bf16 %v1315, %v1315
        %v1875 = vpack.c.bf16 %v1317, %v1317
        %v1876 = vpack.c.bf16 %v1320, %v1320
        %v1877 = vpack.c.bf16 %v1322, %v1322
        %v1878 = vpack.c.bf16 %v1368, %v1368
        %v1879 = vpack.c.bf16 %v1370, %v1370
        %v1880 = vpack.c.bf16 %v1373, %v1373
        %v1881 = vpack.c.bf16 %v1375, %v1375
        %v1882 = vpack.c.bf16 %v1421, %v1421
        %v1883 = vpack.c.bf16 %v1423, %v1423
        %v1884 = vpack.c.bf16 %v1426, %v1426
        %v1885 = vpack.c.bf16 %v1428, %v1428
        %v1886 = vpack.c.bf16 %v1474, %v1474
        %v1887 = vpack.c.bf16 %v1476, %v1476
        %v1888 = vpack.c.bf16 %v1479, %v1479
        %v1889 = vpack.c.bf16 %v1481, %v1481
        %v1890 = vpack.c.bf16 %v1527, %v1527
        %v1891 = vpack.c.bf16 %v1529, %v1529
        %v1892 = vpack.c.bf16 %v1532, %v1532
        %v1893 = vpack.c.bf16 %v1534, %v1534
        %v1894 = vpack.c.bf16 %v1580, %v1580
        %v1895 = vpack.c.bf16 %v1582, %v1582
        %v1896 = vpack.c.bf16 %v1585, %v1585
        %v1897 = vpack.c.bf16 %v1587, %v1587
        %v1898 = vpack.c.bf16 %v1633, %v1633
        %v1899 = vpack.c.bf16 %v1635, %v1635
        %v1900 = vpack.c.bf16 %v1638, %v1638
        %v1901 = vpack.c.bf16 %v1640, %v1640
        %v1902 = vpack.c.bf16 %v1686, %v1686
        %v1903 = vpack.c.bf16 %v1688, %v1688
        %v1904 = vpack.c.bf16 %v1691, %v1691
        %v1905 = vpack.c.bf16 %v1693, %v1693
        %v1906 = vpack.c.bf16 %v1739, %v1739
        %v1907 = vpack.c.bf16 %v1741, %v1741
        %v1908 = vpack.c.bf16 %v1744, %v1744
        %v1909 = vpack.c.bf16 %v1746, %v1746
        %v1910 = vpack.c.bf16 %v1792, %v1792
        %v1911 = vpack.c.bf16 %v1794, %v1794
        %v1912 = vpack.c.bf16 %v1797, %v1797
        %v1913 = vpack.c.bf16 %v1799, %v1799
        %v1914 = vpack.c.bf16 %v1845, %v1845
        %v1915 = vpack.c.bf16 %v1847, %v1847
        %v1916 = vpack.c.bf16 %v1850, %v1850
        %v1917 = vpack.c.bf16 %v1852, %v1852
        %v1918 = vld [vmem:[%s258] sm:$0xff]
        %v1919 = vld [vmem:[%s258 + $0x8] sm:$0xff]
        %v1920 = vld [vmem:[%s258 + $0x10] sm:$0xff]
        %v1921 = vld [vmem:[%s258 + $0x18] sm:$0xff]
        %v1922 = vld [vmem:[%s258 + $0x20] sm:$0xff]
        %v1923 = vld [vmem:[%s258 + $0x28] sm:$0xff]
        %v1924 = vld [vmem:[%s258 + $0x30] sm:$0xff]
        %v1925 = vld [vmem:[%s258 + $0x38] sm:$0xff]
        %v1926 = vld [vmem:[%s258 + $0x40] sm:$0xff]
        %v1927 = vld [vmem:[%s258 + $0x48] sm:$0xff]
        %v1928 = vld [vmem:[%s258 + $0x50] sm:$0xff]
        %v1929 = vld [vmem:[%s258 + $0x58] sm:$0xff]
        %v1930 = vld [vmem:[%s258 + $0x60] sm:$0xff]
        %v1931 = vld [vmem:[%s258 + $0x68] sm:$0xff]
        %v1932 = vld [vmem:[%s258 + $0x70] sm:$0xff]
        %v1933 = vld [vmem:[%s258 + $0x78] sm:$0xff]
        %v1934 = vld [vmem:[%s258 + $0x80] sm:$0xff]
        %v1935 = vld [vmem:[%s258 + $0x88] sm:$0xff]
        %v1936 = vld [vmem:[%s258 + $0x90] sm:$0xff]
        %v1937 = vld [vmem:[%s258 + $0x98] sm:$0xff]
        %v1938 = vld [vmem:[%s258 + $0xa0] sm:$0xff]
        %v1939 = vld [vmem:[%s258 + $0xa8] sm:$0xff]
        %v1940 = vld [vmem:[%s258 + $0xb0] sm:$0xff]
        %v1941 = vld [vmem:[%s258 + $0xb8] sm:$0xff]
        %v1942 = vld [vmem:[%s258 + $0xc0] sm:$0xff]
        %v1943 = vld [vmem:[%s258 + $0xc8] sm:$0xff]
        %v1944 = vld [vmem:[%s258 + $0xd0] sm:$0xff]
        %v1945 = vld [vmem:[%s258 + $0xd8] sm:$0xff]
        %v1946 = vld [vmem:[%s258 + $0xe0] sm:$0xff]
        %v1947 = vld [vmem:[%s258 + $0xe8] sm:$0xff]
        %v1948 = vld [vmem:[%s258 + $0xf0] sm:$0xff]
        %v1949 = vld [vmem:[%s258 + $0xf8] sm:$0xff]
        %v1950 = vmul.f32 %v1918, %v375
        %v1951 = vmul.f32 %v1919, %v380
        %v1952 = vmul.f32 %v1920, %v375
        %v1953 = vmul.f32 %v1921, %v380
        %v1954 = vmul.f32 %v1922, %v375
        %v1955 = vmul.f32 %v1923, %v380
        %v1956 = vmul.f32 %v1924, %v375
        %v1957 = vmul.f32 %v1925, %v380
        %v1958 = vmul.f32 %v1926, %v385
        %v1959 = vmul.f32 %v1927, %v390
        %v1960 = vmul.f32 %v1928, %v385
        %v1961 = vmul.f32 %v1929, %v390
        %v1962 = vmul.f32 %v1930, %v385
        %v1963 = vmul.f32 %v1931, %v390
        %v1964 = vmul.f32 %v1932, %v385
        %v1965 = vmul.f32 %v1933, %v390
        %v1966 = vmul.f32 %v1934, %v395
        %v1967 = vmul.f32 %v1935, %v400
        %v1968 = vmul.f32 %v1936, %v395
        %v1969 = vmul.f32 %v1937, %v400
        %v1970 = vmul.f32 %v1938, %v395
        %v1971 = vmul.f32 %v1939, %v400
        %v1972 = vmul.f32 %v1940, %v395
        %v1973 = vmul.f32 %v1941, %v400
        %v1974 = vmul.f32 %v1942, %v405
        %v1975 = vmul.f32 %v1943, %v410
        %v1976 = vmul.f32 %v1944, %v405
        %v1977 = vmul.f32 %v1945, %v410
        %v1978 = vmul.f32 %v1946, %v405
        %v1979 = vmul.f32 %v1947, %v410
        %v1980 = vmul.f32 %v1948, %v405
        %v1981 = vmul.f32 %v1949, %v410
        %v1982 = vsel %vm508, %v1950, -inf
        %1983 = vmax.xlane.f32.xlu0 %v1982
        %v1984 = vpop.xlane.xlu0 %1983
        %v1985 = vsel %vm508, %v1951, -inf
        %1986 = vmax.xlane.f32.xlu0 %v1985
        %v1987 = vpop.xlane.xlu0 %1986
        %v1988 = vsel %vm508, %v1952, -inf
        %1989 = vmax.xlane.f32.xlu0 %v1988
        %v1990 = vpop.xlane.xlu0 %1989
        %v1991 = vsel %vm508, %v1953, -inf
        %1992 = vmax.xlane.f32.xlu0 %v1991
        %v1993 = vpop.xlane.xlu0 %1992
        %v1994 = vsel %vm508, %v1954, -inf
        %1995 = vmax.xlane.f32.xlu0 %v1994
        %v1996 = vpop.xlane.xlu0 %1995
        %v1997 = vsel %vm508, %v1955, -inf
        %1998 = vmax.xlane.f32.xlu0 %v1997
        %v1999 = vpop.xlane.xlu0 %1998
        %v2000 = vsel %vm508, %v1956, -inf
        %2001 = vmax.xlane.f32.xlu0 %v2000
        %v2002 = vpop.xlane.xlu0 %2001
        %v2003 = vsel %vm508, %v1957, -inf
        %2004 = vmax.xlane.f32.xlu0 %v2003
        %v2005 = vpop.xlane.xlu0 %2004
        %v2006 = vsel %vm508, %v1958, -inf
        %2007 = vmax.xlane.f32.xlu0 %v2006
        %v2008 = vpop.xlane.xlu0 %2007
        %v2009 = vsel %vm508, %v1959, -inf
        %2010 = vmax.xlane.f32.xlu0 %v2009
        %v2011 = vpop.xlane.xlu0 %2010
        %v2012 = vsel %vm508, %v1960, -inf
        %2013 = vmax.xlane.f32.xlu0 %v2012
        %v2014 = vpop.xlane.xlu0 %2013
        %v2015 = vsel %vm508, %v1961, -inf
        %2016 = vmax.xlane.f32.xlu0 %v2015
        %v2017 = vpop.xlane.xlu0 %2016
        %v2018 = vsel %vm508, %v1962, -inf
        %2019 = vmax.xlane.f32.xlu0 %v2018
        %v2020 = vpop.xlane.xlu0 %2019
        %v2021 = vsel %vm508, %v1963, -inf
        %2022 = vmax.xlane.f32.xlu0 %v2021
        %v2023 = vpop.xlane.xlu0 %2022
        %v2024 = vsel %vm508, %v1964, -inf
        %2025 = vmax.xlane.f32.xlu0 %v2024
        %v2026 = vpop.xlane.xlu0 %2025
        %v2027 = vsel %vm508, %v1965, -inf
        %2028 = vmax.xlane.f32.xlu0 %v2027
        %v2029 = vpop.xlane.xlu0 %2028
        %v2030 = vsel %vm508, %v1966, -inf
        %2031 = vmax.xlane.f32.xlu0 %v2030
        %v2032 = vpop.xlane.xlu0 %2031
        %v2033 = vsel %vm508, %v1967, -inf
        %2034 = vmax.xlane.f32.xlu0 %v2033
        %v2035 = vpop.xlane.xlu0 %2034
        %v2036 = vsel %vm508, %v1968, -inf
        %2037 = vmax.xlane.f32.xlu0 %v2036
        %v2038 = vpop.xlane.xlu0 %2037
        %v2039 = vsel %vm508, %v1969, -inf
        %2040 = vmax.xlane.f32.xlu0 %v2039
        %v2041 = vpop.xlane.xlu0 %2040
        %v2042 = vsel %vm508, %v1970, -inf
        %2043 = vmax.xlane.f32.xlu0 %v2042
        %v2044 = vpop.xlane.xlu0 %2043
        %v2045 = vsel %vm508, %v1971, -inf
        %2046 = vmax.xlane.f32.xlu0 %v2045
        %v2047 = vpop.xlane.xlu0 %2046
        %v2048 = vsel %vm508, %v1972, -inf
        %2049 = vmax.xlane.f32.xlu0 %v2048
        %v2050 = vpop.xlane.xlu0 %2049
        %v2051 = vsel %vm508, %v1973, -inf
        %2052 = vmax.xlane.f32.xlu0 %v2051
        %v2053 = vpop.xlane.xlu0 %2052
        %v2054 = vsel %vm508, %v1974, -inf
        %2055 = vmax.xlane.f32.xlu0 %v2054
        %v2056 = vpop.xlane.xlu0 %2055
        %v2057 = vsel %vm508, %v1975, -inf
        %2058 = vmax.xlane.f32.xlu0 %v2057
        %v2059 = vpop.xlane.xlu0 %2058
        %v2060 = vsel %vm508, %v1976, -inf
        %2061 = vmax.xlane.f32.xlu0 %v2060
        %v2062 = vpop.xlane.xlu0 %2061
        %v2063 = vsel %vm508, %v1977, -inf
        %2064 = vmax.xlane.f32.xlu0 %v2063
        %v2065 = vpop.xlane.xlu0 %2064
        %v2066 = vsel %vm508, %v1978, -inf
        %2067 = vmax.xlane.f32.xlu0 %v2066
        %v2068 = vpop.xlane.xlu0 %2067
        %v2069 = vsel %vm508, %v1979, -inf
        %2070 = vmax.xlane.f32.xlu0 %v2069
        %v2071 = vpop.xlane.xlu0 %2070
        %v2072 = vsel %vm508, %v1980, -inf
        %2073 = vmax.xlane.f32.xlu0 %v2072
        %v2074 = vpop.xlane.xlu0 %2073
        %v2075 = vsel %vm508, %v1981, -inf
        %2076 = vmax.xlane.f32.xlu0 %v2075
        %v2077 = vpop.xlane.xlu0 %2076
        %v2078 = vsub.f32 %v1950, %v1984
        %v2079 = vsub.f32 %v1951, %v1987
        %v2080 = vsub.f32 %v1952, %v1990
        %v2081 = vsub.f32 %v1953, %v1993
        %v2082 = vsub.f32 %v1954, %v1996
        %v2083 = vsub.f32 %v1955, %v1999
        %v2084 = vsub.f32 %v1956, %v2002
        %v2085 = vsub.f32 %v1957, %v2005
        %v2086 = vsub.f32 %v1958, %v2008
        %v2087 = vsub.f32 %v1959, %v2011
        %v2088 = vsub.f32 %v1960, %v2014
        %v2089 = vsub.f32 %v1961, %v2017
        %v2090 = vsub.f32 %v1962, %v2020
        %v2091 = vsub.f32 %v1963, %v2023
        %v2092 = vsub.f32 %v1964, %v2026
        %v2093 = vsub.f32 %v1965, %v2029
        %v2094 = vsub.f32 %v1966, %v2032
        %v2095 = vsub.f32 %v1967, %v2035
        %v2096 = vsub.f32 %v1968, %v2038
        %v2097 = vsub.f32 %v1969, %v2041
        %v2098 = vsub.f32 %v1970, %v2044
        %v2099 = vsub.f32 %v1971, %v2047
        %v2100 = vsub.f32 %v1972, %v2050
        %v2101 = vsub.f32 %v1973, %v2053
        %v2102 = vsub.f32 %v1974, %v2056
        %v2103 = vsub.f32 %v1975, %v2059
        %v2104 = vsub.f32 %v1976, %v2062
        %v2105 = vsub.f32 %v1977, %v2065
        %v2106 = vsub.f32 %v1978, %v2068
        %v2107 = vsub.f32 %v1979, %v2071
        %v2108 = vsub.f32 %v1980, %v2074
        %v2109 = vsub.f32 %v1981, %v2077
        %v2110 = vmul.f32 %v2078, 1.442695
        %v2111 = vpow.pop %v2110
        %v2112 = vmul.f32 %v2079, 1.442695
        %v2113 = vpow.pop %v2112
        %v2114 = vmul.f32 %v2080, 1.442695
        %v2115 = vpow.pop %v2114
        %v2116 = vmul.f32 %v2081, 1.442695
        %v2117 = vpow.pop %v2116
        %v2118 = vmul.f32 %v2082, 1.442695
        %v2119 = vpow.pop %v2118
        %v2120 = vmul.f32 %v2083, 1.442695
        %v2121 = vpow.pop %v2120
        %v2122 = vmul.f32 %v2084, 1.442695
        %v2123 = vpow.pop %v2122
        %v2124 = vmul.f32 %v2085, 1.442695
        %v2125 = vpow.pop %v2124
        %v2126 = vmul.f32 %v2086, 1.442695
        %v2127 = vpow.pop %v2126
        %v2128 = vmul.f32 %v2087, 1.442695
        %v2129 = vpow.pop %v2128
        %v2130 = vmul.f32 %v2088, 1.442695
        %v2131 = vpow.pop %v2130
        %v2132 = vmul.f32 %v2089, 1.442695
        %v2133 = vpow.pop %v2132
        %v2134 = vmul.f32 %v2090, 1.442695
        %v2135 = vpow.pop %v2134
        %v2136 = vmul.f32 %v2091, 1.442695
        %v2137 = vpow.pop %v2136
        %v2138 = vmul.f32 %v2092, 1.442695
        %v2139 = vpow.pop %v2138
        %v2140 = vmul.f32 %v2093, 1.442695
        %v2141 = vpow.pop %v2140
        %v2142 = vmul.f32 %v2094, 1.442695
        %v2143 = vpow.pop %v2142
        %v2144 = vmul.f32 %v2095, 1.442695
        %v2145 = vpow.pop %v2144
        %v2146 = vmul.f32 %v2096, 1.442695
        %v2147 = vpow.pop %v2146
        %v2148 = vmul.f32 %v2097, 1.442695
        %v2149 = vpow.pop %v2148
        %v2150 = vmul.f32 %v2098, 1.442695
        %v2151 = vpow.pop %v2150
        %v2152 = vmul.f32 %v2099, 1.442695
        %v2153 = vpow.pop %v2152
        %v2154 = vmul.f32 %v2100, 1.442695
        %v2155 = vpow.pop %v2154
        %v2156 = vmul.f32 %v2101, 1.442695
        %v2157 = vpow.pop %v2156
        %v2158 = vmul.f32 %v2102, 1.442695
        %v2159 = vpow.pop %v2158
        %v2160 = vmul.f32 %v2103, 1.442695
        %v2161 = vpow.pop %v2160
        %v2162 = vmul.f32 %v2104, 1.442695
        %v2163 = vpow.pop %v2162
        %v2164 = vmul.f32 %v2105, 1.442695
        %v2165 = vpow.pop %v2164
        %v2166 = vmul.f32 %v2106, 1.442695
        %v2167 = vpow.pop %v2166
        %v2168 = vmul.f32 %v2107, 1.442695
        %v2169 = vpow.pop %v2168
        %v2170 = vmul.f32 %v2108, 1.442695
        %v2171 = vpow.pop %v2170
        %v2172 = vmul.f32 %v2109, 1.442695
        %v2173 = vpow.pop %v2172
        %v2174 = vsel %vm508, %v2111, 0.0
        %2175 = vadd.xlane.f32.xlu0 %v2174
        %v2176 = vpop.xlane.xlu0 %2175
        %v2177 = vsel %vm508, %v2113, 0.0
        %2178 = vadd.xlane.f32.xlu0 %v2177
        %v2179 = vpop.xlane.xlu0 %2178
        %v2180 = vsel %vm508, %v2115, 0.0
        %2181 = vadd.xlane.f32.xlu0 %v2180
        %v2182 = vpop.xlane.xlu0 %2181
        %v2183 = vsel %vm508, %v2117, 0.0
        %2184 = vadd.xlane.f32.xlu0 %v2183
        %v2185 = vpop.xlane.xlu0 %2184
        %v2186 = vsel %vm508, %v2119, 0.0
        %2187 = vadd.xlane.f32.xlu0 %v2186
        %v2188 = vpop.xlane.xlu0 %2187
        %v2189 = vsel %vm508, %v2121, 0.0
        %2190 = vadd.xlane.f32.xlu0 %v2189
        %v2191 = vpop.xlane.xlu0 %2190
        %v2192 = vsel %vm508, %v2123, 0.0
        %2193 = vadd.xlane.f32.xlu0 %v2192
        %v2194 = vpop.xlane.xlu0 %2193
        %v2195 = vsel %vm508, %v2125, 0.0
        %2196 = vadd.xlane.f32.xlu0 %v2195
        %v2197 = vpop.xlane.xlu0 %2196
        %v2198 = vsel %vm508, %v2127, 0.0
        %2199 = vadd.xlane.f32.xlu0 %v2198
        %v2200 = vpop.xlane.xlu0 %2199
        %v2201 = vsel %vm508, %v2129, 0.0
        %2202 = vadd.xlane.f32.xlu0 %v2201
        %v2203 = vpop.xlane.xlu0 %2202
        %v2204 = vsel %vm508, %v2131, 0.0
        %2205 = vadd.xlane.f32.xlu0 %v2204
        %v2206 = vpop.xlane.xlu0 %2205
        %v2207 = vsel %vm508, %v2133, 0.0
        %2208 = vadd.xlane.f32.xlu0 %v2207
        %v2209 = vpop.xlane.xlu0 %2208
        %v2210 = vsel %vm508, %v2135, 0.0
        %2211 = vadd.xlane.f32.xlu0 %v2210
        %v2212 = vpop.xlane.xlu0 %2211
        %v2213 = vsel %vm508, %v2137, 0.0
        %2214 = vadd.xlane.f32.xlu0 %v2213
        %v2215 = vpop.xlane.xlu0 %2214
        %v2216 = vsel %vm508, %v2139, 0.0
        %2217 = vadd.xlane.f32.xlu0 %v2216
        %v2218 = vpop.xlane.xlu0 %2217
        %v2219 = vsel %vm508, %v2141, 0.0
        %2220 = vadd.xlane.f32.xlu0 %v2219
        %v2221 = vpop.xlane.xlu0 %2220
        %v2222 = vsel %vm508, %v2143, 0.0
        %2223 = vadd.xlane.f32.xlu0 %v2222
        %v2224 = vpop.xlane.xlu0 %2223
        %v2225 = vsel %vm508, %v2145, 0.0
        %2226 = vadd.xlane.f32.xlu0 %v2225
        %v2227 = vpop.xlane.xlu0 %2226
        %v2228 = vsel %vm508, %v2147, 0.0
        %2229 = vadd.xlane.f32.xlu0 %v2228
        %v2230 = vpop.xlane.xlu0 %2229
        %v2231 = vsel %vm508, %v2149, 0.0
        %2232 = vadd.xlane.f32.xlu0 %v2231
        %v2233 = vpop.xlane.xlu0 %2232
        %v2234 = vsel %vm508, %v2151, 0.0
        %2235 = vadd.xlane.f32.xlu0 %v2234
        %v2236 = vpop.xlane.xlu0 %2235
        %v2237 = vsel %vm508, %v2153, 0.0
        %2238 = vadd.xlane.f32.xlu0 %v2237
        %v2239 = vpop.xlane.xlu0 %2238
        %v2240 = vsel %vm508, %v2155, 0.0
        %2241 = vadd.xlane.f32.xlu0 %v2240
        %v2242 = vpop.xlane.xlu0 %2241
        %v2243 = vsel %vm508, %v2157, 0.0
        %2244 = vadd.xlane.f32.xlu0 %v2243
        %v2245 = vpop.xlane.xlu0 %2244
        %v2246 = vsel %vm508, %v2159, 0.0
        %2247 = vadd.xlane.f32.xlu0 %v2246
        %v2248 = vpop.xlane.xlu0 %2247
        %v2249 = vsel %vm508, %v2161, 0.0
        %2250 = vadd.xlane.f32.xlu0 %v2249
        %v2251 = vpop.xlane.xlu0 %2250
        %v2252 = vsel %vm508, %v2163, 0.0
        %2253 = vadd.xlane.f32.xlu0 %v2252
        %v2254 = vpop.xlane.xlu0 %2253
        %v2255 = vsel %vm508, %v2165, 0.0
        %2256 = vadd.xlane.f32.xlu0 %v2255
        %v2257 = vpop.xlane.xlu0 %2256
        %v2258 = vsel %vm508, %v2167, 0.0
        %2259 = vadd.xlane.f32.xlu0 %v2258
        %v2260 = vpop.xlane.xlu0 %2259
        %v2261 = vsel %vm508, %v2169, 0.0
        %2262 = vadd.xlane.f32.xlu0 %v2261
        %v2263 = vpop.xlane.xlu0 %2262
        %v2264 = vsel %vm508, %v2171, 0.0
        %2265 = vadd.xlane.f32.xlu0 %v2264
        %v2266 = vpop.xlane.xlu0 %2265
        %v2267 = vsel %vm508, %v2173, 0.0
        %2268 = vadd.xlane.f32.xlu0 %v2267
        %v2269 = vpop.xlane.xlu0 %2268
        %v2270 = vrcp.pop %v2176
        %v2271 = vrcp.pop %v2179
        %v2272 = vrcp.pop %v2182
        %v2273 = vrcp.pop %v2185
        %v2274 = vrcp.pop %v2188
        %v2275 = vrcp.pop %v2191
        %v2276 = vrcp.pop %v2194
        %v2277 = vrcp.pop %v2197
        %v2278 = vrcp.pop %v2200
        %v2279 = vrcp.pop %v2203
        %v2280 = vrcp.pop %v2206
        %v2281 = vrcp.pop %v2209
        %v2282 = vrcp.pop %v2212
        %v2283 = vrcp.pop %v2215
        %v2284 = vrcp.pop %v2218
        %v2285 = vrcp.pop %v2221
        %v2286 = vrcp.pop %v2224
        %v2287 = vrcp.pop %v2227
        %v2288 = vrcp.pop %v2230
        %v2289 = vrcp.pop %v2233
        %v2290 = vrcp.pop %v2236
        %v2291 = vrcp.pop %v2239
        %v2292 = vrcp.pop %v2242
        %v2293 = vrcp.pop %v2245
        %v2294 = vrcp.pop %v2248
        %v2295 = vrcp.pop %v2251
        %v2296 = vrcp.pop %v2254
        %v2297 = vrcp.pop %v2257
        %v2298 = vrcp.pop %v2260
        %v2299 = vrcp.pop %v2263
        %v2300 = vrcp.pop %v2266
        %v2301 = vrcp.pop %v2269
        %v2302 = vmul.f32 %v2111, %v2270
        %v2303 = vmul.f32 %v2113, %v2271
        %v2304 = vmul.f32 %v2115, %v2272
        %v2305 = vmul.f32 %v2117, %v2273
        %v2306 = vmul.f32 %v2119, %v2274
        %v2307 = vmul.f32 %v2121, %v2275
        %v2308 = vmul.f32 %v2123, %v2276
        %v2309 = vmul.f32 %v2125, %v2277
        %v2310 = vmul.f32 %v2127, %v2278
        %v2311 = vmul.f32 %v2129, %v2279
        %v2312 = vmul.f32 %v2131, %v2280
        %v2313 = vmul.f32 %v2133, %v2281
        %v2314 = vmul.f32 %v2135, %v2282
        %v2315 = vmul.f32 %v2137, %v2283
        %v2316 = vmul.f32 %v2139, %v2284
        %v2317 = vmul.f32 %v2141, %v2285
        %v2318 = vmul.f32 %v2143, %v2286
        %v2319 = vmul.f32 %v2145, %v2287
        %v2320 = vmul.f32 %v2147, %v2288
        %v2321 = vmul.f32 %v2149, %v2289
        %v2322 = vmul.f32 %v2151, %v2290
        %v2323 = vmul.f32 %v2153, %v2291
        %v2324 = vmul.f32 %v2155, %v2292
        %v2325 = vmul.f32 %v2157, %v2293
        %v2326 = vmul.f32 %v2159, %v2294
        %v2327 = vmul.f32 %v2161, %v2295
        %v2328 = vmul.f32 %v2163, %v2296
        %v2329 = vmul.f32 %v2165, %v2297
        %v2330 = vmul.f32 %v2167, %v2298
        %v2331 = vmul.f32 %v2169, %v2299
        %v2332 = vmul.f32 %v2171, %v2300
        %v2333 = vmul.f32 %v2173, %v2301
        %v2334 = vpack.c.bf16 %v2302, %v2302
        %v2335 = vpack.c.bf16 %v2303, %v2303
        %v2336 = vpack.c.bf16 %v2304, %v2304
        %v2337 = vpack.c.bf16 %v2305, %v2305
        %v2338 = vpack.c.bf16 %v2306, %v2306
        %v2339 = vpack.c.bf16 %v2307, %v2307
        %v2340 = vpack.c.bf16 %v2308, %v2308
        %v2341 = vpack.c.bf16 %v2309, %v2309
        %v2342 = vpack.c.bf16 %v2310, %v2310
        %v2343 = vpack.c.bf16 %v2311, %v2311
        %v2344 = vpack.c.bf16 %v2312, %v2312
        %v2345 = vpack.c.bf16 %v2313, %v2313
        %v2346 = vpack.c.bf16 %v2314, %v2314
        %v2347 = vpack.c.bf16 %v2315, %v2315
        %v2348 = vpack.c.bf16 %v2316, %v2316
        %v2349 = vpack.c.bf16 %v2317, %v2317
        %v2350 = vpack.c.bf16 %v2318, %v2318
        %v2351 = vpack.c.bf16 %v2319, %v2319
        %v2352 = vpack.c.bf16 %v2320, %v2320
        %v2353 = vpack.c.bf16 %v2321, %v2321
        %v2354 = vpack.c.bf16 %v2322, %v2322
        %v2355 = vpack.c.bf16 %v2323, %v2323
        %v2356 = vpack.c.bf16 %v2324, %v2324
        %v2357 = vpack.c.bf16 %v2325, %v2325
        %v2358 = vpack.c.bf16 %v2326, %v2326
        %v2359 = vpack.c.bf16 %v2327, %v2327
        %v2360 = vpack.c.bf16 %v2328, %v2328
        %v2361 = vpack.c.bf16 %v2329, %v2329
        %v2362 = vpack.c.bf16 %v2330, %v2330
        %v2363 = vpack.c.bf16 %v2331, %v2331
        %v2364 = vpack.c.bf16 %v2332, %v2332
        %v2365 = vpack.c.bf16 %v2333, %v2333
        %v2368 = vunpack.c.l.b16 %v2334
        %v2369 = vunpack.c.l.b16 %v2335
        %v2370 = vpack.c.b16 %v2369, %v2368
        %v2375 = vunpack.c.l.b16 %v1854
        %v2376 = vunpack.c.l.b16 %v1855
        %v2377 = vunpack.c.l.b16 %v1856
        %v2378 = vunpack.c.l.b16 %v1857
        %v2379 = vpack.c.b16 %v2376, %v2375
        %v2380 = vpack.c.b16 %v2378, %v2377
        %v2384 = vsel %vm508, %v2370, 0
        %2386 = vmatpush.bf16.msra.mxu0 0
        %2387 = vmatpush.bf16.msra.mxu0 0
        %2388 = vmatpush.bf16.msra.mxu0 0
        %2389 = vmatpush.bf16.msra.mxu0 0
        %2390 = vmatpush.bf16.msra.mxu0 0
        %2391 = vmatpush.bf16.msra.mxu0 0
        %2392 = vmatpush.bf16.msra.mxu0 %v2380
        %2393 = vmatpush.bf16.msra.mxu0 %v2379
        %2394 = vmatmul.bf16.gmra.mxu0 %v2384
        %v2395 = vpop.f32.mrf.mxu0
        %v2396 = vadd.f32 0.0, %v2395
        %v2397 = vpop.f32.mrf.mxu0
        %v2398 = vadd.f32 0.0, %v2397
        %2399 = vdwg.mxu0
        %v2402 = vunpack.c.l.b16 %v2336
        %v2403 = vunpack.c.l.b16 %v2337
        %v2404 = vpack.c.b16 %v2403, %v2402
        %v2409 = vunpack.c.l.b16 %v1858
        %v2410 = vunpack.c.l.b16 %v1859
        %v2411 = vunpack.c.l.b16 %v1860
        %v2412 = vunpack.c.l.b16 %v1861
        %v2413 = vpack.c.b16 %v2410, %v2409
        %v2414 = vpack.c.b16 %v2412, %v2411
        %v2418 = vsel %vm508, %v2404, 0
        %2420 = vmatpush.bf16.msra.mxu0 0
        %2421 = vmatpush.bf16.msra.mxu0 0
        %2422 = vmatpush.bf16.msra.mxu0 0
        %2423 = vmatpush.bf16.msra.mxu0 0
        %2424 = vmatpush.bf16.msra.mxu0 0
        %2425 = vmatpush.bf16.msra.mxu0 0
        %2426 = vmatpush.bf16.msra.mxu0 %v2414
        %2427 = vmatpush.bf16.msra.mxu0 %v2413
        %2428 = vmatmul.bf16.gmra.mxu0 %v2418
        %v2429 = vpop.f32.mrf.mxu0
        %v2430 = vadd.f32 0.0, %v2429
        %v2431 = vpop.f32.mrf.mxu0
        %v2432 = vadd.f32 0.0, %v2431
        %2433 = vdwg.mxu0
        %v2436 = vunpack.c.l.b16 %v2338
        %v2437 = vunpack.c.l.b16 %v2339
        %v2438 = vpack.c.b16 %v2437, %v2436
        %v2443 = vunpack.c.l.b16 %v1862
        %v2444 = vunpack.c.l.b16 %v1863
        %v2445 = vunpack.c.l.b16 %v1864
        %v2446 = vunpack.c.l.b16 %v1865
        %v2447 = vpack.c.b16 %v2444, %v2443
        %v2448 = vpack.c.b16 %v2446, %v2445
        %v2452 = vsel %vm508, %v2438, 0
        %2454 = vmatpush.bf16.msra.mxu0 0
        %2455 = vmatpush.bf16.msra.mxu0 0
        %2456 = vmatpush.bf16.msra.mxu0 0
        %2457 = vmatpush.bf16.msra.mxu0 0
        %2458 = vmatpush.bf16.msra.mxu0 0
        %2459 = vmatpush.bf16.msra.mxu0 0
        %2460 = vmatpush.bf16.msra.mxu0 %v2448
        %2461 = vmatpush.bf16.msra.mxu0 %v2447
        %2462 = vmatmul.bf16.gmra.mxu0 %v2452
        %v2463 = vpop.f32.mrf.mxu0
        %v2464 = vadd.f32 0.0, %v2463
        %v2465 = vpop.f32.mrf.mxu0
        %v2466 = vadd.f32 0.0, %v2465
        %2467 = vdwg.mxu0
        %v2470 = vunpack.c.l.b16 %v2340
        %v2471 = vunpack.c.l.b16 %v2341
        %v2472 = vpack.c.b16 %v2471, %v2470
        %v2477 = vunpack.c.l.b16 %v1866
        %v2478 = vunpack.c.l.b16 %v1867
        %v2479 = vunpack.c.l.b16 %v1868
        %v2480 = vunpack.c.l.b16 %v1869
        %v2481 = vpack.c.b16 %v2478, %v2477
        %v2482 = vpack.c.b16 %v2480, %v2479
        %v2486 = vsel %vm508, %v2472, 0
        %2488 = vmatpush.bf16.msra.mxu0 0
        %2489 = vmatpush.bf16.msra.mxu0 0
        %2490 = vmatpush.bf16.msra.mxu0 0
        %2491 = vmatpush.bf16.msra.mxu0 0
        %2492 = vmatpush.bf16.msra.mxu0 0
        %2493 = vmatpush.bf16.msra.mxu0 0
        %2494 = vmatpush.bf16.msra.mxu0 %v2482
        %2495 = vmatpush.bf16.msra.mxu0 %v2481
        %2496 = vmatmul.bf16.gmra.mxu0 %v2486
        %v2497 = vpop.f32.mrf.mxu0
        %v2498 = vadd.f32 0.0, %v2497
        %v2499 = vpop.f32.mrf.mxu0
        %v2500 = vadd.f32 0.0, %v2499
        %2501 = vdwg.mxu0
        %v2504 = vunpack.c.l.b16 %v2342
        %v2505 = vunpack.c.l.b16 %v2343
        %v2506 = vpack.c.b16 %v2505, %v2504
        %v2511 = vunpack.c.l.b16 %v1870
        %v2512 = vunpack.c.l.b16 %v1871
        %v2513 = vunpack.c.l.b16 %v1872
        %v2514 = vunpack.c.l.b16 %v1873
        %v2515 = vpack.c.b16 %v2512, %v2511
        %v2516 = vpack.c.b16 %v2514, %v2513
        %v2520 = vsel %vm508, %v2506, 0
        %2522 = vmatpush.bf16.msra.mxu0 0
        %2523 = vmatpush.bf16.msra.mxu0 0
        %2524 = vmatpush.bf16.msra.mxu0 0
        %2525 = vmatpush.bf16.msra.mxu0 0
        %2526 = vmatpush.bf16.msra.mxu0 0
        %2527 = vmatpush.bf16.msra.mxu0 0
        %2528 = vmatpush.bf16.msra.mxu0 %v2516
        %2529 = vmatpush.bf16.msra.mxu0 %v2515
        %2530 = vmatmul.bf16.gmra.mxu0 %v2520
        %v2531 = vpop.f32.mrf.mxu0
        %v2532 = vadd.f32 0.0, %v2531
        %v2533 = vpop.f32.mrf.mxu0
        %v2534 = vadd.f32 0.0, %v2533
        %2535 = vdwg.mxu0
        %v2538 = vunpack.c.l.b16 %v2344
        %v2539 = vunpack.c.l.b16 %v2345
        %v2540 = vpack.c.b16 %v2539, %v2538
        %v2545 = vunpack.c.l.b16 %v1874
        %v2546 = vunpack.c.l.b16 %v1875
        %v2547 = vunpack.c.l.b16 %v1876
        %v2548 = vunpack.c.l.b16 %v1877
        %v2549 = vpack.c.b16 %v2546, %v2545
        %v2550 = vpack.c.b16 %v2548, %v2547
        %v2554 = vsel %vm508, %v2540, 0
        %2556 = vmatpush.bf16.msra.mxu0 0
        %2557 = vmatpush.bf16.msra.mxu0 0
        %2558 = vmatpush.bf16.msra.mxu0 0
        %2559 = vmatpush.bf16.msra.mxu0 0
        %2560 = vmatpush.bf16.msra.mxu0 0
        %2561 = vmatpush.bf16.msra.mxu0 0
        %2562 = vmatpush.bf16.msra.mxu0 %v2550
        %2563 = vmatpush.bf16.msra.mxu0 %v2549
        %2564 = vmatmul.bf16.gmra.mxu0 %v2554
        %v2565 = vpop.f32.mrf.mxu0
        %v2566 = vadd.f32 0.0, %v2565
        %v2567 = vpop.f32.mrf.mxu0
        %v2568 = vadd.f32 0.0, %v2567
        %2569 = vdwg.mxu0
        %v2572 = vunpack.c.l.b16 %v2346
        %v2573 = vunpack.c.l.b16 %v2347
        %v2574 = vpack.c.b16 %v2573, %v2572
        %v2579 = vunpack.c.l.b16 %v1878
        %v2580 = vunpack.c.l.b16 %v1879
        %v2581 = vunpack.c.l.b16 %v1880
        %v2582 = vunpack.c.l.b16 %v1881
        %v2583 = vpack.c.b16 %v2580, %v2579
        %v2584 = vpack.c.b16 %v2582, %v2581
        %v2588 = vsel %vm508, %v2574, 0
        %2590 = vmatpush.bf16.msra.mxu0 0
        %2591 = vmatpush.bf16.msra.mxu0 0
        %2592 = vmatpush.bf16.msra.mxu0 0
        %2593 = vmatpush.bf16.msra.mxu0 0
        %2594 = vmatpush.bf16.msra.mxu0 0
        %2595 = vmatpush.bf16.msra.mxu0 0
        %2596 = vmatpush.bf16.msra.mxu0 %v2584
        %2597 = vmatpush.bf16.msra.mxu0 %v2583
        %2598 = vmatmul.bf16.gmra.mxu0 %v2588
        %v2599 = vpop.f32.mrf.mxu0
        %v2600 = vadd.f32 0.0, %v2599
        %v2601 = vpop.f32.mrf.mxu0
        %v2602 = vadd.f32 0.0, %v2601
        %2603 = vdwg.mxu0
        %v2606 = vunpack.c.l.b16 %v2348
        %v2607 = vunpack.c.l.b16 %v2349
        %v2608 = vpack.c.b16 %v2607, %v2606
        %v2613 = vunpack.c.l.b16 %v1882
        %v2614 = vunpack.c.l.b16 %v1883
        %v2615 = vunpack.c.l.b16 %v1884
        %v2616 = vunpack.c.l.b16 %v1885
        %v2617 = vpack.c.b16 %v2614, %v2613
        %v2618 = vpack.c.b16 %v2616, %v2615
        %v2622 = vsel %vm508, %v2608, 0
        %2624 = vmatpush.bf16.msra.mxu0 0
        %2625 = vmatpush.bf16.msra.mxu0 0
        %2626 = vmatpush.bf16.msra.mxu0 0
        %2627 = vmatpush.bf16.msra.mxu0 0
        %2628 = vmatpush.bf16.msra.mxu0 0
        %2629 = vmatpush.bf16.msra.mxu0 0
        %2630 = vmatpush.bf16.msra.mxu0 %v2618
        %2631 = vmatpush.bf16.msra.mxu0 %v2617
        %2632 = vmatmul.bf16.gmra.mxu0 %v2622
        %v2633 = vpop.f32.mrf.mxu0
        %v2634 = vadd.f32 0.0, %v2633
        %v2635 = vpop.f32.mrf.mxu0
        %v2636 = vadd.f32 0.0, %v2635
        %2637 = vdwg.mxu0
        %v2640 = vunpack.c.l.b16 %v2350
        %v2641 = vunpack.c.l.b16 %v2351
        %v2642 = vpack.c.b16 %v2641, %v2640
        %v2647 = vunpack.c.l.b16 %v1886
        %v2648 = vunpack.c.l.b16 %v1887
        %v2649 = vunpack.c.l.b16 %v1888
        %v2650 = vunpack.c.l.b16 %v1889
        %v2651 = vpack.c.b16 %v2648, %v2647
        %v2652 = vpack.c.b16 %v2650, %v2649
        %v2656 = vsel %vm508, %v2642, 0
        %2658 = vmatpush.bf16.msra.mxu0 0
        %2659 = vmatpush.bf16.msra.mxu0 0
        %2660 = vmatpush.bf16.msra.mxu0 0
        %2661 = vmatpush.bf16.msra.mxu0 0
        %2662 = vmatpush.bf16.msra.mxu0 0
        %2663 = vmatpush.bf16.msra.mxu0 0
        %2664 = vmatpush.bf16.msra.mxu0 %v2652
        %2665 = vmatpush.bf16.msra.mxu0 %v2651
        %2666 = vmatmul.bf16.gmra.mxu0 %v2656
        %v2667 = vpop.f32.mrf.mxu0
        %v2668 = vadd.f32 0.0, %v2667
        %v2669 = vpop.f32.mrf.mxu0
        %v2670 = vadd.f32 0.0, %v2669
        %2671 = vdwg.mxu0
        %v2674 = vunpack.c.l.b16 %v2352
        %v2675 = vunpack.c.l.b16 %v2353
        %v2676 = vpack.c.b16 %v2675, %v2674
        %v2681 = vunpack.c.l.b16 %v1890
        %v2682 = vunpack.c.l.b16 %v1891
        %v2683 = vunpack.c.l.b16 %v1892
        %v2684 = vunpack.c.l.b16 %v1893
        %v2685 = vpack.c.b16 %v2682, %v2681
        %v2686 = vpack.c.b16 %v2684, %v2683
        %v2690 = vsel %vm508, %v2676, 0
        %2692 = vmatpush.bf16.msra.mxu0 0
        %2693 = vmatpush.bf16.msra.mxu0 0
        %2694 = vmatpush.bf16.msra.mxu0 0
        %2695 = vmatpush.bf16.msra.mxu0 0
        %2696 = vmatpush.bf16.msra.mxu0 0
        %2697 = vmatpush.bf16.msra.mxu0 0
        %2698 = vmatpush.bf16.msra.mxu0 %v2686
        %2699 = vmatpush.bf16.msra.mxu0 %v2685
        %2700 = vmatmul.bf16.gmra.mxu0 %v2690
        %v2701 = vpop.f32.mrf.mxu0
        %v2702 = vadd.f32 0.0, %v2701
        %v2703 = vpop.f32.mrf.mxu0
        %v2704 = vadd.f32 0.0, %v2703
        %2705 = vdwg.mxu0
        %v2708 = vunpack.c.l.b16 %v2354
        %v2709 = vunpack.c.l.b16 %v2355
        %v2710 = vpack.c.b16 %v2709, %v2708
        %v2715 = vunpack.c.l.b16 %v1894
        %v2716 = vunpack.c.l.b16 %v1895
        %v2717 = vunpack.c.l.b16 %v1896
        %v2718 = vunpack.c.l.b16 %v1897
        %v2719 = vpack.c.b16 %v2716, %v2715
        %v2720 = vpack.c.b16 %v2718, %v2717
        %v2724 = vsel %vm508, %v2710, 0
        %2726 = vmatpush.bf16.msra.mxu0 0
        %2727 = vmatpush.bf16.msra.mxu0 0
        %2728 = vmatpush.bf16.msra.mxu0 0
        %2729 = vmatpush.bf16.msra.mxu0 0
        %2730 = vmatpush.bf16.msra.mxu0 0
        %2731 = vmatpush.bf16.msra.mxu0 0
        %2732 = vmatpush.bf16.msra.mxu0 %v2720
        %2733 = vmatpush.bf16.msra.mxu0 %v2719
        %2734 = vmatmul.bf16.gmra.mxu0 %v2724
        %v2735 = vpop.f32.mrf.mxu0
        %v2736 = vadd.f32 0.0, %v2735
        %v2737 = vpop.f32.mrf.mxu0
        %v2738 = vadd.f32 0.0, %v2737
        %2739 = vdwg.mxu0
        %v2742 = vunpack.c.l.b16 %v2356
        %v2743 = vunpack.c.l.b16 %v2357
        %v2744 = vpack.c.b16 %v2743, %v2742
        %v2749 = vunpack.c.l.b16 %v1898
        %v2750 = vunpack.c.l.b16 %v1899
        %v2751 = vunpack.c.l.b16 %v1900
        %v2752 = vunpack.c.l.b16 %v1901
        %v2753 = vpack.c.b16 %v2750, %v2749
        %v2754 = vpack.c.b16 %v2752, %v2751
        %v2758 = vsel %vm508, %v2744, 0
        %2760 = vmatpush.bf16.msra.mxu0 0
        %2761 = vmatpush.bf16.msra.mxu0 0
        %2762 = vmatpush.bf16.msra.mxu0 0
        %2763 = vmatpush.bf16.msra.mxu0 0
        %2764 = vmatpush.bf16.msra.mxu0 0
        %2765 = vmatpush.bf16.msra.mxu0 0
        %2766 = vmatpush.bf16.msra.mxu0 %v2754
        %2767 = vmatpush.bf16.msra.mxu0 %v2753
        %2768 = vmatmul.bf16.gmra.mxu0 %v2758
        %v2769 = vpop.f32.mrf.mxu0
        %v2770 = vadd.f32 0.0, %v2769
        %v2771 = vpop.f32.mrf.mxu0
        %v2772 = vadd.f32 0.0, %v2771
        %2773 = vdwg.mxu0
        %v2776 = vunpack.c.l.b16 %v2358
        %v2777 = vunpack.c.l.b16 %v2359
        %v2778 = vpack.c.b16 %v2777, %v2776
        %v2783 = vunpack.c.l.b16 %v1902
        %v2784 = vunpack.c.l.b16 %v1903
        %v2785 = vunpack.c.l.b16 %v1904
        %v2786 = vunpack.c.l.b16 %v1905
        %v2787 = vpack.c.b16 %v2784, %v2783
        %v2788 = vpack.c.b16 %v2786, %v2785
        %v2792 = vsel %vm508, %v2778, 0
        %2794 = vmatpush.bf16.msra.mxu0 0
        %2795 = vmatpush.bf16.msra.mxu0 0
        %2796 = vmatpush.bf16.msra.mxu0 0
        %2797 = vmatpush.bf16.msra.mxu0 0
        %2798 = vmatpush.bf16.msra.mxu0 0
        %2799 = vmatpush.bf16.msra.mxu0 0
        %2800 = vmatpush.bf16.msra.mxu0 %v2788
        %2801 = vmatpush.bf16.msra.mxu0 %v2787
        %2802 = vmatmul.bf16.gmra.mxu0 %v2792
        %v2803 = vpop.f32.mrf.mxu0
        %v2804 = vadd.f32 0.0, %v2803
        %v2805 = vpop.f32.mrf.mxu0
        %v2806 = vadd.f32 0.0, %v2805
        %2807 = vdwg.mxu0
        %v2810 = vunpack.c.l.b16 %v2360
        %v2811 = vunpack.c.l.b16 %v2361
        %v2812 = vpack.c.b16 %v2811, %v2810
        %v2817 = vunpack.c.l.b16 %v1906
        %v2818 = vunpack.c.l.b16 %v1907
        %v2819 = vunpack.c.l.b16 %v1908
        %v2820 = vunpack.c.l.b16 %v1909
        %v2821 = vpack.c.b16 %v2818, %v2817
        %v2822 = vpack.c.b16 %v2820, %v2819
        %v2826 = vsel %vm508, %v2812, 0
        %2828 = vmatpush.bf16.msra.mxu0 0
        %2829 = vmatpush.bf16.msra.mxu0 0
        %2830 = vmatpush.bf16.msra.mxu0 0
        %2831 = vmatpush.bf16.msra.mxu0 0
        %2832 = vmatpush.bf16.msra.mxu0 0
        %2833 = vmatpush.bf16.msra.mxu0 0
        %2834 = vmatpush.bf16.msra.mxu0 %v2822
        %2835 = vmatpush.bf16.msra.mxu0 %v2821
        %2836 = vmatmul.bf16.gmra.mxu0 %v2826
        %v2837 = vpop.f32.mrf.mxu0
        %v2838 = vadd.f32 0.0, %v2837
        %v2839 = vpop.f32.mrf.mxu0
        %v2840 = vadd.f32 0.0, %v2839
        %2841 = vdwg.mxu0
        %v2844 = vunpack.c.l.b16 %v2362
        %v2845 = vunpack.c.l.b16 %v2363
        %v2846 = vpack.c.b16 %v2845, %v2844
        %v2851 = vunpack.c.l.b16 %v1910
        %v2852 = vunpack.c.l.b16 %v1911
        %v2853 = vunpack.c.l.b16 %v1912
        %v2854 = vunpack.c.l.b16 %v1913
        %v2855 = vpack.c.b16 %v2852, %v2851
        %v2856 = vpack.c.b16 %v2854, %v2853
        %v2860 = vsel %vm508, %v2846, 0
        %2862 = vmatpush.bf16.msra.mxu0 0
        %2863 = vmatpush.bf16.msra.mxu0 0
        %2864 = vmatpush.bf16.msra.mxu0 0
        %2865 = vmatpush.bf16.msra.mxu0 0
        %2866 = vmatpush.bf16.msra.mxu0 0
        %2867 = vmatpush.bf16.msra.mxu0 0
        %2868 = vmatpush.bf16.msra.mxu0 %v2856
        %2869 = vmatpush.bf16.msra.mxu0 %v2855
        %2870 = vmatmul.bf16.gmra.mxu0 %v2860
        %v2871 = vpop.f32.mrf.mxu0
        %v2872 = vadd.f32 0.0, %v2871
        %v2873 = vpop.f32.mrf.mxu0
        %v2874 = vadd.f32 0.0, %v2873
        %2875 = vdwg.mxu0
        %v2878 = vunpack.c.l.b16 %v2364
        %v2879 = vunpack.c.l.b16 %v2365
        %v2880 = vpack.c.b16 %v2879, %v2878
        %v2885 = vunpack.c.l.b16 %v1914
        %v2886 = vunpack.c.l.b16 %v1915
        %v2887 = vunpack.c.l.b16 %v1916
        %v2888 = vunpack.c.l.b16 %v1917
        %v2889 = vpack.c.b16 %v2886, %v2885
        %v2890 = vpack.c.b16 %v2888, %v2887
        %v2894 = vsel %vm508, %v2880, 0
        %2896 = vmatpush.bf16.msra.mxu0 0
        %2897 = vmatpush.bf16.msra.mxu0 0
        %2898 = vmatpush.bf16.msra.mxu0 0
        %2899 = vmatpush.bf16.msra.mxu0 0
        %2900 = vmatpush.bf16.msra.mxu0 0
        %2901 = vmatpush.bf16.msra.mxu0 0
        %2902 = vmatpush.bf16.msra.mxu0 %v2890
        %2903 = vmatpush.bf16.msra.mxu0 %v2889
        %2904 = vmatmul.bf16.gmra.mxu0 %v2894
        %v2905 = vpop.f32.mrf.mxu0
        %v2906 = vadd.f32 0.0, %v2905
        %v2907 = vpop.f32.mrf.mxu0
        %v2908 = vadd.f32 0.0, %v2907
        %2909 = vdwg.mxu0
        %2910 = vst.msk [vmem:[%s319] sm:$0xff] %vm508, %v2396
        %2911 = vst.msk [vmem:[%s319 + $0x8] sm:$0xff] %vm508, %v2398
        %2912 = vst.msk [vmem:[%s319 + $0x10] sm:$0xff] %vm508, %v2430
        %2913 = vst.msk [vmem:[%s319 + $0x18] sm:$0xff] %vm508, %v2432
        %2914 = vst.msk [vmem:[%s319 + $0x20] sm:$0xff] %vm508, %v2464
        %2915 = vst.msk [vmem:[%s319 + $0x28] sm:$0xff] %vm508, %v2466
        %2916 = vst.msk [vmem:[%s319 + $0x30] sm:$0xff] %vm508, %v2498
        %2917 = vst.msk [vmem:[%s319 + $0x38] sm:$0xff] %vm508, %v2500
        %2918 = vst.msk [vmem:[%s319 + $0x40] sm:$0xff] %vm508, %v2532
        %2919 = vst.msk [vmem:[%s319 + $0x48] sm:$0xff] %vm508, %v2534
        %2920 = vst.msk [vmem:[%s319 + $0x50] sm:$0xff] %vm508, %v2566
        %2921 = vst.msk [vmem:[%s319 + $0x58] sm:$0xff] %vm508, %v2568
        %2922 = vst.msk [vmem:[%s319 + $0x60] sm:$0xff] %vm508, %v2600
        %2923 = vst.msk [vmem:[%s319 + $0x68] sm:$0xff] %vm508, %v2602
        %2924 = vst.msk [vmem:[%s319 + $0x70] sm:$0xff] %vm508, %v2634
        %2925 = vst.msk [vmem:[%s319 + $0x78] sm:$0xff] %vm508, %v2636
        %2926 = vst.msk [vmem:[%s319 + $0x80] sm:$0xff] %vm508, %v2668
        %2927 = vst.msk [vmem:[%s319 + $0x88] sm:$0xff] %vm508, %v2670
        %2928 = vst.msk [vmem:[%s319 + $0x90] sm:$0xff] %vm508, %v2702
        %2929 = vst.msk [vmem:[%s319 + $0x98] sm:$0xff] %vm508, %v2704
        %2930 = vst.msk [vmem:[%s319 + $0xa0] sm:$0xff] %vm508, %v2736
        %2931 = vst.msk [vmem:[%s319 + $0xa8] sm:$0xff] %vm508, %v2738
        %2932 = vst.msk [vmem:[%s319 + $0xb0] sm:$0xff] %vm508, %v2770
        %2933 = vst.msk [vmem:[%s319 + $0xb8] sm:$0xff] %vm508, %v2772
        %2934 = vst.msk [vmem:[%s319 + $0xc0] sm:$0xff] %vm508, %v2804
        %2935 = vst.msk [vmem:[%s319 + $0xc8] sm:$0xff] %vm508, %v2806
        %2936 = vst.msk [vmem:[%s319 + $0xd0] sm:$0xff] %vm508, %v2838
        %2937 = vst.msk [vmem:[%s319 + $0xd8] sm:$0xff] %vm508, %v2840
        %2938 = vst.msk [vmem:[%s319 + $0xe0] sm:$0xff] %vm508, %v2872
        %2939 = vst.msk [vmem:[%s319 + $0xe8] sm:$0xff] %vm508, %v2874
        %2940 = vst.msk [vmem:[%s319 + $0xf0] sm:$0xff] %vm508, %v2906
        %2941 = vst.msk [vmem:[%s319 + $0xf8] sm:$0xff] %vm508, %v2908
        %s2942 = sand.u32 %s136, 1
        %s2943 = scalar_lea.sflag [#allocation4], %s2942
        %s2944 = sand.u32 %s136, 1
        %s2945 = smul.addr %s2944, 256
        %s2946 = scalar_lea.vmem [#allocation8], %s2945
        // Predicated region
        $region49: #{tpu_custom_call.1} parent=35 // pred_check
          %p2947 = pneg %p146
        $region50: #{tpu_custom_call.1} parent=35 // pred_check_branch
          %2949 = sbr.rel (%p2947) target = $region52
        $region51: #{tpu_custom_call.1} parent=35 // pred_region
          %s2950 = smul.u32 4, %s24
          %2952 = vsyncadd %s2943, 0
          %s2953 = smul.addr %s2950, 8
          %s2954 = smul.addr %s2953, 8
          %s2955 = scalar_lea.hbm %s4, %s2954
          %s2956 = sshll.u32 %s2946, 4
          %s2957 = int_to_ptr.vmem [resolvable:$true] %s2956
          %s2958 = sshll.u32 %s2955, 4
          %s2959 = int_to_ptr.hbm [resolvable:$true] %s2958
          %2964 = dma.vmem_to_hbm [thread:$0]  %s2957, 4096, %s2959, %s2943, 128, 128, 8
        $region52: #{tpu_custom_call.1} parent=35 // pred_fallthru
          _
      $region36: #{tpu_custom_call.1} parent=5 // pred_fallthru
        _
      %p2965 = scmp.le.s32.totalorder 2, %s19
      // Predicated region
      $region53: #{tpu_custom_call.1} parent=5 // pred_check
        %p2966 = pneg %p2965
      $region54: #{tpu_custom_call.1} parent=5 // pred_check_branch
        %2968 = sbr.rel (%p2966) target = $region56
      $region55: #{tpu_custom_call.1} parent=5 // pred_region
        %s2969 = ssub.s32 %s19, 2
        // Predicated region
        $region57: #{tpu_custom_call.1} parent=55 // pred_check
          %p2970 = pneg %p152
        $region58: #{tpu_custom_call.1} parent=55 // pred_check_branch
          %2972 = sbr.rel (%p2970) target = $region60
        $region59: #{tpu_custom_call.1} parent=55 // pred_region
          %s2973 = sand.u32 %s137, 1
          %s2974 = scalar_lea.sflag [#allocation4], %s2973
          %s2975 = sand.u32 %s137, 1
          %s2976 = smul.addr %s2975, 256
          %s2977 = scalar_lea.vmem [#allocation8], %s2976
          %2979 = dma.done %s2974, 4096
        $region60: #{tpu_custom_call.1} parent=55 // pred_fallthru
          _
      $region56: #{tpu_custom_call.1} parent=5 // pred_fallthru
        _
    $region6: #{tpu_custom_call.1} parent=1 // loop_footer
      %s23 = sadd.s32 1, %s19
    $region7: #{tpu_custom_call.1} parent=1 // loop_footer_branch
      %18 = sbr.rel target = $region3
    $region8: #{tpu_custom_call.1} parent=1 // loop_exit
      _
    %2980 = vsyncpa [#allocation3], 1
    %s2981 = scalar_lea.sflag [#allocation3], 1
    %2982 = vsyncpa %s2981, 1
    %2983 = vsyncpa [#allocation6], 1
    %s2984 = scalar_lea.sflag [#allocation6], 1
    %2985 = vsyncpa %s2984, 1
    %2986 = vsyncpa [#allocation4], 1
    %s2987 = scalar_lea.sflag [#allocation4], 1
    %2988 = vsyncpa %s2987, 1

</llo_original>
